<compile_context>
chip_gen: v7x
topology: tpu7x:2x2x1
jax: 0.10.0
libtpu: 0.0.40
codegen_flags: <defaults>
</compile_context>

<pallas_src>
import numpy as np
import jax
import jax.numpy as jnp
from jax import lax
from jax.experimental import pallas as pl
from jax.experimental.pallas import tpu as pltpu

EPS = 1e-5
N_CLASSES = 10
N_PAIRS = N_CLASSES * (N_CLASSES - 1) // 2  # 45

K_PAD = 128    # avg-pooled feature length padded 81 -> 128 (MXU/lane-aligned K)
G1 = 180       # stage1 features per maxpool window (20 * 3 * 3)
G1_PAD = 256   # stage1 window group padded to a lane-aligned width
G2 = 60        # stage2 features per maxpool window (15 * 2 * 2), left unpadded


# ----------------------------------------------------------------------------
# Parameter init (deterministic, synthetic) and affine folding (numpy glue).
# ----------------------------------------------------------------------------
def init_params(seed=0):
    rng = np.random.default_rng(seed)
    p = {}
    # stage1 TinyNet: conv(1->20,3x3), bn(20), fc(180->10)
    p["W1c"] = rng.normal(0.0, 0.2, (20, 3, 3)).astype(np.float32)
    p["b1c"] = rng.normal(0.0, 0.1, (20,)).astype(np.float32)
    p["g1"] = rng.normal(1.0, 0.1, (20,)).astype(np.float32)
    p["bt1"] = rng.normal(0.0, 0.1, (20,)).astype(np.float32)
    p["rm1"] = rng.normal(0.0, 0.1, (20,)).astype(np.float32)
    p["rv1"] = rng.uniform(0.5, 1.5, (20,)).astype(np.float32)
    p["W1fc"] = rng.normal(0.0, 0.1, (10, 180)).astype(np.float32)
    p["b1fc"] = rng.normal(0.0, 0.1, (10,)).astype(np.float32)
    # stage2: 45 TinyNet2 experts: conv(1->15,5x5), bn(15), fc(60->2)
    p["W2c"] = rng.normal(0.0, 0.2, (N_PAIRS, 15, 5, 5)).astype(np.float32)
    p["b2c"] = rng.normal(0.0, 0.1, (N_PAIRS, 15)).astype(np.float32)
    p["g2"] = rng.normal(1.0, 0.1, (N_PAIRS, 15)).astype(np.float32)
    p["bt2"] = rng.normal(0.0, 0.1, (N_PAIRS, 15)).astype(np.float32)
    p["rm2"] = rng.normal(0.0, 0.1, (N_PAIRS, 15)).astype(np.float32)
    p["rv2"] = rng.uniform(0.5, 1.5, (N_PAIRS, 15)).astype(np.float32)
    p["W2fc"] = rng.normal(0.0, 0.1, (N_PAIRS, 2, 60)).astype(np.float32)
    p["b2fc"] = rng.normal(0.0, 0.1, (N_PAIRS, 2)).astype(np.float32)
    return p


def _avgpool_matrix(H, k):
    Ho = H // k
    A = np.zeros((H * H, Ho * Ho), np.float32)
    for a in range(k):
        for b in range(k):
            rows = ((k * np.arange(Ho)[:, None] + a) * H
                    + (k * np.arange(Ho)[None, :] + b)).ravel()
            cols = (np.arange(Ho)[:, None] * Ho + np.arange(Ho)[None, :]).ravel()
            A[rows, cols] = 1.0 / (k * k)
    return A


def _avgpool_matrix_padded(H=28, k=3, k_pad=K_PAD):
    Ho = H // k
    A = np.zeros((H * H, k_pad), np.float32)
    A[:, :Ho * Ho] = _avgpool_matrix(H, k)
    return A


def _conv_matrix(Wc, Hin):
    C, k, _ = Wc.shape
    Hout = Hin - k + 1
    M = np.zeros((Hin * Hin, C * Hout * Hout), np.float32)
    for ch in range(C):
        for ki in range(k):
            for kj in range(k):
                rows = ((np.arange(Hout)[:, None] + ki) * Hin
                        + (np.arange(Hout)[None, :] + kj)).ravel()
                cols = (ch * Hout * Hout
                        + np.arange(Hout)[:, None] * Hout
                        + np.arange(Hout)[None, :]).ravel()
                M[rows, cols] = Wc[ch, ki, kj]
    return M


def _pool_order(C, Hout):
    # columns reordered to [window(di,dj), channel, ph, pw]
    Hp = Hout // 2
    order = []
    for di in range(2):
        for dj in range(2):
            ch = np.arange(C)[:, None, None]
            i = np.arange(Hp)[None, :, None]
            j = np.arange(Hp)[None, None, :]
            order.append((ch * Hout * Hout + (2 * i + di) * Hout + (2 * j + dj)).ravel())
    return np.concatenate(order)


def _fold_conv_bn(Wc, bc, gamma, beta, rmean, rvar, Hd=9, k_pad=K_PAD, group_pad=None):
    """Fold Conv2d(valid) + eval-BatchNorm into xp @ M + c; columns grouped per
    MaxPool2d(2) window as [window, ch, ph, pw]; each window group padded to group_pad."""
    C, k, _ = Wc.shape
    Hout = Hd - k + 1
    Hp = Hout // 2
    g = C * Hp * Hp
    gp = g if group_pad is None else group_pad
    s = gamma / np.sqrt(rvar + EPS)
    t = beta - rmean * s
    Mc = _conv_matrix(Wc, Hd) * np.repeat(s, Hout * Hout)[None, :]   # (81, C*Hout*Hout)
    cb = np.repeat(s * bc + t, Hout * Hout)
    order = _pool_order(C, Hout)
    Mc = Mc[:, order]
    cb = cb[order]
    M = np.zeros((k_pad, 4 * gp), np.float32)
    c = np.zeros((4 * gp,), np.float32)
    for w in range(4):
        M[:Hd * Hd, w * gp:w * gp + g] = Mc[:, w * g:(w + 1) * g]
        c[w * gp:w * gp + g] = cb[w * g:(w + 1) * g]
    # pad columns carry zero weight and zero bias -> ReLU output 0 -> max over windows 0,
    # and the FC weight rows for pad columns are zero, so results are unchanged.
    return M.astype(np.float32), c.astype(np.float32)


def fold_params(p):
    A = _avgpool_matrix_padded()                                       # (784, 128)
    M1, c1 = _fold_conv_bn(p["W1c"], p["b1c"], p["g1"], p["bt1"],
                           p["rm1"], p["rv1"], group_pad=G1_PAD)       # (128, 1024)
    W1fcT = np.zeros((G1_PAD, N_CLASSES), np.float32)
    W1fcT[:G1] = p["W1fc"].T                                           # pad rows are zero
    M2s, c2s = [], []
    for m in range(N_PAIRS):
        M, c = _fold_conv_bn(p["W2c"][m], p["b2c"][m], p["g2"][m],
                             p["bt2"][m], p["rm2"][m], p["rv2"][m], group_pad=None)
        M2s.append(M)
        c2s.append(c)
    return {
        "A": jnp.asarray(A),                                           # (784, 128)
        "M1": jnp.asarray(M1),                                         # (128, 1024)
        "c1": jnp.asarray(c1[None, :]),                                # (1, 1024)
        "W1fcT": jnp.asarray(W1fcT),                                   # (256, 10)
        "b1fc": jnp.asarray(p["b1fc"][None, :]),                       # (1, 10)
        "M2": jnp.asarray(np.stack(M2s)),                              # (45, 128, 240)
        "c2": jnp.asarray(np.stack(c2s)[:, None, :]),                  # (45, 1, 240)
        "W2fcT": jnp.asarray(np.transpose(p["W2fc"], (0, 2, 1))),      # (45, 60, 2)
        "b2fc": jnp.asarray(p["b2fc"][:, None, :]),                    # (45, 1, 2)
    }


# ----------------------------------------------------------------------------
# Pallas kernels.
# ----------------------------------------------------------------------------
def stage1_kernel(x_ref, a_ref, m1_ref, c1_ref, wfc_ref, bfc_ref,
                  logits_ref, ls_ref, xp_ref):
    # x: (TM,784)  A: (784,128)  M1: (128,1024)  -> avgpool, conv+BN, ReLU, maxpool, fc, lsm
    xp = jnp.dot(x_ref[...], a_ref[...], preferred_element_type=jnp.float32)   # (TM,128)
    xp_ref[...] = xp                                                            # reused by stage2
    z = jnp.dot(xp, m1_ref[...], preferred_element_type=jnp.float32) + c1_ref[...]
    z = jnp.maximum(z, 0.0)
    # MaxPool2d(2): max over the 4 lane-aligned window groups of width G1_PAD
    pooled = jnp.maximum(
        jnp.maximum(z[:, 0:G1_PAD], z[:, G1_PAD:2 * G1_PAD]),
        jnp.maximum(z[:, 2 * G1_PAD:3 * G1_PAD], z[:, 3 * G1_PAD:4 * G1_PAD]))  # (TM,256)
    logits = jnp.dot(pooled, wfc_ref[...], preferred_element_type=jnp.float32) + bfc_ref[...]
    logits_ref[...] = logits
    m = jnp.max(logits, axis=1, keepdims=True)
    s = logits - m
    ls_ref[...] = s - jnp.log(jnp.sum(jnp.exp(s), axis=1, keepdims=True))


def stage2_kernel(midx_ref, xp_ref, m2_ref, c2_ref, w2_ref, b2_ref, o2_ref):
    # Whole expert bank is VMEM-resident (constant index_map); pick the expert in-kernel.
    b = pl.program_id(0)
    m = midx_ref[b]
    z = jnp.dot(xp_ref[0], m2_ref[m], preferred_element_type=jnp.float32) + c2_ref[m]  # (1,240)
    z = jnp.maximum(z, 0.0)
    pooled = jnp.maximum(jnp.maximum(z[:, 0:G2], z[:, G2:2 * G2]),
                         jnp.maximum(z[:, 2 * G2:3 * G2], z[:, 3 * G2:4 * G2]))        # (1,60)
    o2_ref[0] = jnp.dot(pooled, w2_ref[m], preferred_element_type=jnp.float32) + b2_ref[m]


def scatter_logsoftmax_kernel(o2_ref, idx_ref, out_ref):
    # Vectorized epilogue for the whole batch: scatter the 2 expert logits into a 10-wide row
    # initialized at -100, then log-softmax.
    o2 = o2_ref[...]                                   # (B, 2)
    idx = idx_ref[...]                                 # (B, 2) int32, idx[:,0] < idx[:,1]
    bsz = o2.shape[0]
    cols = lax.broadcasted_iota(jnp.int32, (bsz, N_CLASSES), 1)
    row = jnp.full((bsz, N_CLASSES), -100.0, dtype=jnp.float32)
    row = jnp.where(cols == idx[:, 0:1], o2[:, 0:1], row)
    row = jnp.where(cols == idx[:, 1:2], o2[:, 1:2], row)
    m = jnp.max(row, axis=1, keepdims=True)
    s = row - m
    out_ref[...] = s - jnp.log(jnp.sum(jnp.exp(s), axis=1, keepdims=True))


# ----------------------------------------------------------------------------
# Wrapper (glue: padding, top-2 index selection, pallas_call plumbing).
# ----------------------------------------------------------------------------
def two_stage_forward(x, fp):
    B = x.shape[0]
    x_flat = x.reshape(B, 28 * 28).astype(jnp.float32)

    # ---- stage 1: batch-tiled ("parallel" axis), avgpool computed in-kernel ----
    TM = 256 if B >= 256 else ((B + 7) // 8) * 8
    Bpad = ((B + TM - 1) // TM) * TM
    x_pad = jnp.pad(x_flat, ((0, Bpad - B), (0, 0)))
    nb = Bpad // TM

    logits1, ls1, xp = pl.pallas_call(
        stage1_kernel,
        out_shape=(jax.ShapeDtypeStruct((Bpad, N_CLASSES), jnp.float32),
                   jax.ShapeDtypeStruct((Bpad, N_CLASSES), jnp.float32),
                   jax.ShapeDtypeStruct((Bpad, K_PAD), jnp.float32)),
        grid=(nb,),
        in_specs=[
            pl.BlockSpec((TM, 784), lambda i: (i, 0)),
            pl.BlockSpec((784, K_PAD), lambda i: (0, 0)),
            pl.BlockSpec((K_PAD, 4 * G1_PAD), lambda i: (0, 0)),
            pl.BlockSpec((1, 4 * G1_PAD), lambda i: (0, 0)),
            pl.BlockSpec((G1_PAD, N_CLASSES), lambda i: (0, 0)),
            pl.BlockSpec((1, N_CLASSES), lambda i: (0, 0)),
        ],
        out_specs=(pl.BlockSpec((TM, N_CLASSES), lambda i: (i, 0)),
                   pl.BlockSpec((TM, N_CLASSES), lambda i: (i, 0)),
                   pl.BlockSpec((TM, K_PAD), lambda i: (i, 0))),
        compiler_params=pltpu.CompilerParams(dimension_semantics=("parallel",)),
    )(x_pad, fp["A"], fp["M1"], fp["c1"], fp["W1fcT"], fp["b1fc"])
    logits1 = logits1[:B]
    ls1 = ls1[:B]
    xp = xp[:B]

    # ---- top-2 class selection (no argsort, no host round trip) ----
    _, top2 = lax.top_k(logits1, 2)                     # same order as log-softmax
    idx = jnp.sort(top2, axis=1).astype(jnp.int32)      # (B,2) with idx[:,0] < idx[:,1]
    i1 = idx[:, 0]
    i2 = idx[:, 1]
    # position of model "i1_i2" in the (i1<i2) enumeration order
    midx = (9 * i1 - (i1 * (i1 - 1)) // 2 + (i2 - i1 - 1)).astype(jnp.int32)

    # ---- stage 2: resident expert bank, per-example expert picked in-kernel ----
    xp3 = xp.reshape(B, 1, K_PAD)
    grid_spec = pltpu.PrefetchScalarGridSpec(
        num_scalar_prefetch=1,
        grid=(B,),
        in_specs=[
            pl.BlockSpec((1, 1, K_PAD), lambda b, m: (b, 0, 0)),
            pl.BlockSpec((N_PAIRS, K_PAD, 4 * G2), lambda b, m: (0, 0, 0)),  # whole bank, DMA'd once
            pl.BlockSpec((N_PAIRS, 1, 4 * G2), lambda b, m: (0, 0, 0)),
            pl.BlockSpec((N_PAIRS, G2, 2), lambda b, m: (0, 0, 0)),
            pl.BlockSpec((N_PAIRS, 1, 2), lambda b, m: (0, 0, 0)),
        ],
        out_specs=pl.BlockSpec((1, 1, 2), lambda b, m: (b, 0, 0)),
    )
    o2 = pl.pallas_call(
        stage2_kernel,
        out_shape=jax.ShapeDtypeStruct((B, 1, 2), jnp.float32),
        grid_spec=grid_spec,
        compiler_params=pltpu.CompilerParams(
            dimension_semantics=("parallel",),          # megacore sharding on v7x
            vmem_limit_bytes=32 * 1024 * 1024),         # resident bank fits on v5e too
    )(midx, xp3, fp["M2"], fp["c2"], fp["W2fcT"], fp["b2fc"])

    # ---- epilogue: scatter into 10-wide rows (-100 fill) + log-softmax, one grid step ----
    out = pl.pallas_call(
        scatter_logsoftmax_kernel,
        out_shape=jax.ShapeDtypeStruct((B, N_CLASSES), jnp.float32),
        grid=(1,),
        in_specs=[pl.BlockSpec((B, 2), lambda i: (0, 0)),
                  pl.BlockSpec((B, 2), lambda i: (0, 0))],
        out_specs=pl.BlockSpec((B, N_CLASSES), lambda i: (0, 0)),
    )(o2.reshape(B, 2), idx)

    return logits1, ls1, out, idx


# ----------------------------------------------------------------------------
# Pure-JAX/numpy reference (for correctness checking only).
# ----------------------------------------------------------------------------
def _ref_tinynet2(x1, p, m):
    xd = x1[:, :, :27, :27].reshape(1, 1, 9, 3, 9, 3).mean(axis=(3, 5))
    y = lax.conv_general_dilated(xd, jnp.asarray(p["W2c"][m][:, None, :, :]), (1, 1), "VALID",
                                 dimension_numbers=("NCHW", "OIHW", "NCHW"),
                                 precision=lax.Precision.HIGHEST)
    y = y + jnp.asarray(p["b2c"][m])[None, :, None, None]
    s = p["g2"][m] / np.sqrt(p["rv2"][m] + EPS)
    t = p["bt2"][m] - p["rm2"][m] * s
    y = y * jnp.asarray(s)[None, :, None, None] + jnp.asarray(t)[None, :, None, None]
    y = jnp.maximum(y, 0.0)
    y = y[:, :, :4, :4].reshape(1, 15, 2, 2, 2, 2).max(axis=(3, 5))
    f = y.reshape(1, 60)
    o2 = jnp.dot(f, jnp.asarray(p["W2fc"][m].T), precision=lax.Precision.HIGHEST) \
        + jnp.asarray(p["b2fc"][m])[None, :]
    return np.asarray(o2)


def ref_forward(x, p):
    B = x.shape[0]
    xd = x[:, :, :27, :27].reshape(B, 1, 9, 3, 9, 3).mean(axis=(3, 5))
    y = lax.conv_general_dilated(xd, jnp.asarray(p["W1c"][:, None, :, :]), (1, 1), "VALID",
                                 dimension_numbers=("NCHW", "OIHW", "NCHW"),
                                 precision=lax.Precision.HIGHEST)
    y = y + jnp.asarray(p["b1c"])[None, :, None, None]
    s = p["g1"] / np.sqrt(p["rv1"] + EPS)
    t = p["bt1"] - p["rm1"] * s
    y = y * jnp.asarray(s)[None, :, None, None] + jnp.asarray(t)[None, :, None, None]
    y = jnp.maximum(y, 0.0)
    y = y[:, :, :6, :6].reshape(B, 20, 3, 2, 3, 2).max(axis=(3, 5))
    f = y.reshape(B, 180)
    logits1 = jnp.dot(f, jnp.asarray(p["W1fc"].T), precision=lax.Precision.HIGHEST) \
        + jnp.asarray(p["b1fc"])[None, :]
    ls1 = jax.nn.log_softmax(logits1, axis=1)
    idx = np.sort(np.argsort(np.asarray(ls1), axis=1)[:, -2:], axis=1)
    out = np.full((B, 10), -100.0, np.float32)
    for b in range(B):
        a, c = int(idx[b, 0]), int(idx[b, 1])
        m = 9 * a - (a * (a - 1)) // 2 + (c - a - 1)
        o2 = _ref_tinynet2(x[b:b + 1], p, m)
        out[b, a] = o2[0, 0]
        out[b, c] = o2[0, 1]
    mx = out.max(axis=1, keepdims=True)
    sh = out - mx
    out_ls = sh - np.log(np.exp(sh).sum(axis=1, keepdims=True))
    return np.asarray(logits1), np.asarray(ls1), out_ls, idx


# ----------------------------------------------------------------------------
if __name__ == "__main__":
    B = 2
    key = jax.random.PRNGKey(0)
    x = jax.random.normal(key, (B, 1, 28, 28), dtype=jnp.float32)  # NCHW like PyTorch

    params = init_params(seed=0)
    folded = fold_params(params)

    fwd = jax.jit(two_stage_forward)
    logits1, ls1, out, idx = fwd(x, folded)
    jax.block_until_ready(out)

    # correctness check against a plain-JAX reference of the PyTorch forward (eval mode)
    logits1_ref, ls1_ref, out_ref, idx_ref = ref_forward(x, params)
    np.testing.assert_allclose(np.asarray(logits1), logits1_ref, rtol=5e-3, atol=5e-3)
    np.testing.assert_allclose(np.asarray(ls1), ls1_ref, rtol=5e-3, atol=5e-3)
    np.testing.assert_allclose(np.asarray(out), out_ref, rtol=5e-3, atol=5e-3)

    # expert-name strings are host-side glue, built OUTSIDE the forward path
    idx_host = np.asarray(jax.device_get(idx))
    names = [f"{int(a)}_{int(b)}" for a, b in idx_host]
    ref_names = [f"{int(a)}_{int(b)}" for a, b in idx_ref]
    assert names == ref_names, (names, ref_names)

    print("KERNEL_OK")
</pallas_src>

<mosaic_0001>
module attributes {stable_mosaic.version = 11 : i64} {
  func.func @stage1_kernel(%arg0: i32, %arg1: memref<8x784xf32, #tpu.memory_space<vmem>>, %arg2: memref<784x128xf32, #tpu.memory_space<vmem>>, %arg3: memref<128x1024xf32, #tpu.memory_space<vmem>>, %arg4: memref<1x1024xf32, #tpu.memory_space<vmem>>, %arg5: memref<256x10xf32, #tpu.memory_space<vmem>>, %arg6: memref<1x10xf32, #tpu.memory_space<vmem>>, %arg7: memref<8x10xf32, #tpu.memory_space<vmem>>, %arg8: memref<8x10xf32, #tpu.memory_space<vmem>>, %arg9: memref<8x128xf32, #tpu.memory_space<vmem>>) attributes {dimension_semantics = [#tpu.dimension_semantics<parallel>], iteration_bounds = array<i64: 1>, scalar_prefetch = 0 : i64, scratch_operands = 0 : i64, tpu.core_type = #tpu.core_type<tc>, window_params = [{transform_indices = @transform_0, window_bounds = array<i64: 8, 784>}, {pipeline_mode = #tpu.pipeline_mode<synchronous>, transform_indices = @transform_1, window_bounds = array<i64: 784, 128>}, {pipeline_mode = #tpu.pipeline_mode<synchronous>, transform_indices = @transform_2, window_bounds = array<i64: 128, 1024>}, {pipeline_mode = #tpu.pipeline_mode<synchronous>, transform_indices = @transform_3, window_bounds = array<i64: 1, 1024>}, {pipeline_mode = #tpu.pipeline_mode<synchronous>, transform_indices = @transform_4, window_bounds = array<i64: 256, 10>}, {pipeline_mode = #tpu.pipeline_mode<synchronous>, transform_indices = @transform_5, window_bounds = array<i64: 1, 10>}, {transform_indices = @transform_6, window_bounds = array<i64: 8, 10>}, {transform_indices = @transform_7, window_bounds = array<i64: 8, 10>}, {transform_indices = @transform_8, window_bounds = array<i64: 8, 128>}]} {
    %c0 = arith.constant 0 : index
    %c0_0 = arith.constant 0 : index
    %0 = vector.load %arg1[%c0, %c0_0] : memref<8x784xf32, #tpu.memory_space<vmem>>, vector<8x784xf32>
    %c0_1 = arith.constant 0 : index
    %c0_2 = arith.constant 0 : index
    %1 = vector.load %arg2[%c0_1, %c0_2] : memref<784x128xf32, #tpu.memory_space<vmem>>, vector<784x128xf32>
    %cst = arith.constant dense<0.000000e+00> : vector<8x128xf32>
    %2 = tpu.matmul %0, %1, %cst {dimension_numbers = #tpu.dot_dimension_numbers<[1], [0], [0], [1], [0, 0, 1, 1], [], []>} : vector<8x784xf32>, vector<784x128xf32>, vector<8x128xf32> -> vector<8x128xf32>
    %c0_3 = arith.constant 0 : index
    %c0_4 = arith.constant 0 : index
    %3 = vector.load %arg9[%c0_3, %c0_4] : memref<8x128xf32, #tpu.memory_space<vmem>>, vector<8x128xf32>
    tpu.vector_store %arg9[%c0_3, %c0_4], %2 {strides = array<i32>} : memref<8x128xf32, #tpu.memory_space<vmem>>, vector<8x128xf32>,
    %c0_5 = arith.constant 0 : index
    %c0_6 = arith.constant 0 : index
    %4 = vector.load %arg3[%c0_5, %c0_6] : memref<128x1024xf32, #tpu.memory_space<vmem>>, vector<128x1024xf32>
    %cst_7 = arith.constant dense<0.000000e+00> : vector<8x1024xf32>
    %5 = tpu.matmul %2, %4, %cst_7 {dimension_numbers = #tpu.dot_dimension_numbers<[1], [0], [0], [1], [0, 0, 1, 1], [], []>} : vector<8x128xf32>, vector<128x1024xf32>, vector<8x1024xf32> -> vector<8x1024xf32>
    %c0_8 = arith.constant 0 : index
    %c0_9 = arith.constant 0 : index
    %6 = vector.load %arg4[%c0_8, %c0_9] : memref<1x1024xf32, #tpu.memory_space<vmem>>, vector<1x1024xf32>
    %7 = vector.broadcast %6 : vector<1x1024xf32> to vector<8x1024xf32>
    %8 = arith.addf %5, %7 : vector<8x1024xf32>
    %cst_10 = arith.constant 0.000000e+00 : f32
    %9 = vector.broadcast %cst_10 : f32 to vector<8x1024xf32>
    %10 = arith.maximumf %8, %9 : vector<8x1024xf32>
    %11 = vector.extract_strided_slice %10 {offsets = [0, 0], sizes = [8, 256], strides = [1, 1]} : vector<8x1024xf32> to vector<8x256xf32>
    %12 = vector.extract_strided_slice %10 {offsets = [0, 256], sizes = [8, 256], strides = [1, 1]} : vector<8x1024xf32> to vector<8x256xf32>
    %13 = arith.maximumf %11, %12 : vector<8x256xf32>
    %14 = vector.extract_strided_slice %10 {offsets = [0, 512], sizes = [8, 256], strides = [1, 1]} : vector<8x1024xf32> to vector<8x256xf32>
    %15 = vector.extract_strided_slice %10 {offsets = [0, 768], sizes = [8, 256], strides = [1, 1]} : vector<8x1024xf32> to vector<8x256xf32>
    %16 = arith.maximumf %14, %15 : vector<8x256xf32>
    %17 = arith.maximumf %13, %16 : vector<8x256xf32>
    %c0_11 = arith.constant 0 : index
    %c0_12 = arith.constant 0 : index
    %18 = vector.load %arg5[%c0_11, %c0_12] : memref<256x10xf32, #tpu.memory_space<vmem>>, vector<256x10xf32>
    %cst_13 = arith.constant dense<0.000000e+00> : vector<8x10xf32>
    %19 = tpu.matmul %17, %18, %cst_13 {dimension_numbers = #tpu.dot_dimension_numbers<[1], [0], [0], [1], [0, 0, 1, 1], [], []>} : vector<8x256xf32>, vector<256x10xf32>, vector<8x10xf32> -> vector<8x10xf32>
    %c0_14 = arith.constant 0 : index
    %c0_15 = arith.constant 0 : index
    %20 = vector.load %arg6[%c0_14, %c0_15] : memref<1x10xf32, #tpu.memory_space<vmem>>, vector<1x10xf32>
    %21 = vector.broadcast %20 : vector<1x10xf32> to vector<8x10xf32>
    %22 = arith.addf %19, %21 : vector<8x10xf32>
    %c0_16 = arith.constant 0 : index
    %c0_17 = arith.constant 0 : index
    %23 = vector.load %arg7[%c0_16, %c0_17] : memref<8x10xf32, #tpu.memory_space<vmem>>, vector<8x10xf32>
    tpu.vector_store %arg7[%c0_16, %c0_17], %22 {strides = array<i32>} : memref<8x10xf32, #tpu.memory_space<vmem>>, vector<8x10xf32>,
    %cst_18 = arith.constant dense<0xFF800000> : vector<8xf32>
    %24 = vector.multi_reduction <maximumf>, %22, %cst_18 [1] : vector<8x10xf32> to vector<8xf32>
    %25 = vector.shape_cast %24 : vector<8xf32> to vector<8x1xf32>
    %26 = vector.broadcast %25 : vector<8x1xf32> to vector<8x10xf32>
    %27 = arith.subf %22, %26 : vector<8x10xf32>
    %28 = math.exp %27 : vector<8x10xf32>
    %cst_19 = arith.constant dense<0.000000e+00> : vector<8xf32>
    %29 = vector.multi_reduction <add>, %28, %cst_19 [1] : vector<8x10xf32> to vector<8xf32>
    %30 = vector.shape_cast %29 : vector<8xf32> to vector<8x1xf32>
    %31 = math.log %30 : vector<8x1xf32>
    %32 = vector.broadcast %31 : vector<8x1xf32> to vector<8x10xf32>
    %33 = arith.subf %27, %32 : vector<8x10xf32>
    %c0_20 = arith.constant 0 : index
    %c0_21 = arith.constant 0 : index
    %34 = vector.load %arg8[%c0_20, %c0_21] : memref<8x10xf32, #tpu.memory_space<vmem>>, vector<8x10xf32>
    tpu.vector_store %arg8[%c0_20, %c0_21], %33 {strides = array<i32>} : memref<8x10xf32, #tpu.memory_space<vmem>>, vector<8x10xf32>,
    return
  }
  func.func @transform_0(%arg0: i32) -> (i32, i32) {
    %c0_i32 = arith.constant 0 : i32
    %c0_i32_0 = arith.constant 0 : i32
    return %arg0, %c0_i32 : i32, i32
  }
  func.func @transform_1(%arg0: i32) -> (i32, i32) {
    %c0_i32 = arith.constant 0 : i32
    %c0_i32_0 = arith.constant 0 : i32
    %c0_i32_1 = arith.constant 0 : i32
    return %c0_i32, %c0_i32_0 : i32, i32
  }
  func.func @transform_2(%arg0: i32) -> (i32, i32) {
    %c0_i32 = arith.constant 0 : i32
    %c0_i32_0 = arith.constant 0 : i32
    %c0_i32_1 = arith.constant 0 : i32
    return %c0_i32, %c0_i32_0 : i32, i32
  }
  func.func @transform_3(%arg0: i32) -> (i32, i32) {
    %c0_i32 = arith.constant 0 : i32
    %c0_i32_0 = arith.constant 0 : i32
    %c0_i32_1 = arith.constant 0 : i32
    return %c0_i32, %c0_i32_0 : i32, i32
  }
  func.func @transform_4(%arg0: i32) -> (i32, i32) {
    %c0_i32 = arith.constant 0 : i32
    %c0_i32_0 = arith.constant 0 : i32
    %c0_i32_1 = arith.constant 0 : i32
    return %c0_i32, %c0_i32_0 : i32, i32
  }
  func.func @transform_5(%arg0: i32) -> (i32, i32) {
    %c0_i32 = arith.constant 0 : i32
    %c0_i32_0 = arith.constant 0 : i32
    %c0_i32_1 = arith.constant 0 : i32
    return %c0_i32, %c0_i32_0 : i32, i32
  }
  func.func @transform_6(%arg0: i32) -> (i32, i32) {
    %c0_i32 = arith.constant 0 : i32
    %c0_i32_0 = arith.constant 0 : i32
    return %arg0, %c0_i32 : i32, i32
  }
  func.func @transform_7(%arg0: i32) -> (i32, i32) {
    %c0_i32 = arith.constant 0 : i32
    %c0_i32_0 = arith.constant 0 : i32
    return %arg0, %c0_i32 : i32, i32
  }
  func.func @transform_8(%arg0: i32) -> (i32, i32) {
    %c0_i32 = arith.constant 0 : i32
    %c0_i32_0 = arith.constant 0 : i32
    return %arg0, %c0_i32 : i32, i32
  }
}

module attributes {stable_mosaic.version = 11 : i64} {
  func.func @stage2_kernel(%arg0: i32, %arg1: memref<2xi32, #tpu.memory_space<smem>>, %arg2: memref<1x1x128xf32, #tpu.memory_space<vmem>>, %arg3: memref<45x128x240xf32, #tpu.memory_space<vmem>>, %arg4: memref<45x1x240xf32, #tpu.memory_space<vmem>>, %arg5: memref<45x60x2xf32, #tpu.memory_space<vmem>>, %arg6: memref<45x1x2xf32, #tpu.memory_space<vmem>>, %arg7: memref<1x1x2xf32, #tpu.memory_space<vmem>>) attributes {dimension_semantics = [#tpu.dimension_semantics<parallel>], iteration_bounds = array<i64: 2>, scalar_prefetch = 1 : i64, scratch_operands = 0 : i64, tpu.core_type = #tpu.core_type<tc>, window_params = [{transform_indices = @transform_0, window_bounds = array<i64: 1, 1, 128>}, {pipeline_mode = #tpu.pipeline_mode<synchronous>, transform_indices = @transform_1, window_bounds = array<i64: 45, 128, 240>}, {pipeline_mode = #tpu.pipeline_mode<synchronous>, transform_indices = @transform_2, window_bounds = array<i64: 45, 1, 240>}, {pipeline_mode = #tpu.pipeline_mode<synchronous>, transform_indices = @transform_3, window_bounds = array<i64: 45, 60, 2>}, {pipeline_mode = #tpu.pipeline_mode<synchronous>, transform_indices = @transform_4, window_bounds = array<i64: 45, 1, 2>}, {transform_indices = @transform_5, window_bounds = array<i64: 1, 1, 2>}]} {
    %0 = arith.index_cast %arg0 : i32 to index
    %1 = memref.load %arg1[%0] : memref<2xi32, #tpu.memory_space<smem>>
    %c0 = arith.constant 0 : index
    %c0_0 = arith.constant 0 : index
    %c0_1 = arith.constant 0 : index
    %2 = vector.load %arg2[%c0, %c0_0, %c0_1] : memref<1x1x128xf32, #tpu.memory_space<vmem>>, vector<1x1x128xf32>
    %3 = vector.shape_cast %2 : vector<1x1x128xf32> to vector<1x128xf32>
    %4 = arith.index_cast %1 : i32 to index
    %c0_2 = arith.constant 0 : index
    %c0_3 = arith.constant 0 : index
    %5 = vector.load %arg3[%4, %c0_2, %c0_3] : memref<45x128x240xf32, #tpu.memory_space<vmem>>, vector<1x128x240xf32>
    %6 = vector.shape_cast %5 : vector<1x128x240xf32> to vector<128x240xf32>
    %cst = arith.constant dense<0.000000e+00> : vector<1x240xf32>
    %7 = tpu.matmul %3, %6, %cst {dimension_numbers = #tpu.dot_dimension_numbers<[1], [0], [0], [1], [0, 0, 1, 1], [], []>} : vector<1x128xf32>, vector<128x240xf32>, vector<1x240xf32> -> vector<1x240xf32>
    %8 = arith.index_cast %1 : i32 to index
    %c0_4 = arith.constant 0 : index
    %c0_5 = arith.constant 0 : index
    %9 = vector.load %arg4[%8, %c0_4, %c0_5] : memref<45x1x240xf32, #tpu.memory_space<vmem>>, vector<1x1x240xf32>
    %10 = vector.shape_cast %9 : vector<1x1x240xf32> to vector<1x240xf32>
    %11 = arith.addf %7, %10 : vector<1x240xf32>
    %cst_6 = arith.constant 0.000000e+00 : f32
    %12 = vector.broadcast %cst_6 : f32 to vector<1x240xf32>
    %13 = arith.maximumf %11, %12 : vector<1x240xf32>
    %14 = vector.extract_strided_slice %13 {offsets = [0, 0], sizes = [1, 60], strides = [1, 1]} : vector<1x240xf32> to vector<1x60xf32>
    %15 = vector.extract_strided_slice %13 {offsets = [0, 60], sizes = [1, 60], strides = [1, 1]} : vector<1x240xf32> to vector<1x60xf32>
    %16 = arith.maximumf %14, %15 : vector<1x60xf32>
    %17 = vector.extract_strided_slice %13 {offsets = [0, 120], sizes = [1, 60], strides = [1, 1]} : vector<1x240xf32> to vector<1x60xf32>
    %18 = vector.extract_strided_slice %13 {offsets = [0, 180], sizes = [1, 60], strides = [1, 1]} : vector<1x240xf32> to vector<1x60xf32>
    %19 = arith.maximumf %17, %18 : vector<1x60xf32>
    %20 = arith.maximumf %16, %19 : vector<1x60xf32>
    %21 = arith.index_cast %1 : i32 to index
    %c0_7 = arith.constant 0 : index
    %c0_8 = arith.constant 0 : index
    %22 = vector.load %arg5[%21, %c0_7, %c0_8] : memref<45x60x2xf32, #tpu.memory_space<vmem>>, vector<1x60x2xf32>
    %23 = vector.shape_cast %22 : vector<1x60x2xf32> to vector<60x2xf32>
    %cst_9 = arith.constant dense<0.000000e+00> : vector<1x2xf32>
    %24 = tpu.matmul %20, %23, %cst_9 {dimension_numbers = #tpu.dot_dimension_numbers<[1], [0], [0], [1], [0, 0, 1, 1], [], []>} : vector<1x60xf32>, vector<60x2xf32>, vector<1x2xf32> -> vector<1x2xf32>
    %25 = arith.index_cast %1 : i32 to index
    %c0_10 = arith.constant 0 : index
    %c0_11 = arith.constant 0 : index
    %26 = vector.load %arg6[%25, %c0_10, %c0_11] : memref<45x1x2xf32, #tpu.memory_space<vmem>>, vector<1x1x2xf32>
    %27 = vector.shape_cast %26 : vector<1x1x2xf32> to vector<1x2xf32>
    %28 = arith.addf %24, %27 : vector<1x2xf32>
    %c0_12 = arith.constant 0 : index
    %c0_13 = arith.constant 0 : index
    %c0_14 = arith.constant 0 : index
    %29 = vector.load %arg7[%c0_12, %c0_13, %c0_14] : memref<1x1x2xf32, #tpu.memory_space<vmem>>, vector<1x1x2xf32>
    %30 = vector.shape_cast %29 : vector<1x1x2xf32> to vector<1x2xf32>
    %31 = vector.shape_cast %28 : vector<1x2xf32> to vector<1x1x2xf32>
    tpu.vector_store %arg7[%c0_12, %c0_13, %c0_14], %31 {strides = array<i32>} : memref<1x1x2xf32, #tpu.memory_space<vmem>>, vector<1x1x2xf32>,
    return
  }
  func.func @transform_0(%arg0: i32, %arg1: memref<2xi32, #tpu.memory_space<smem>>) -> (i32, i32, i32) {
    %c0_i32 = arith.constant 0 : i32
    %c0_i32_0 = arith.constant 0 : i32
    %c0_i32_1 = arith.constant 0 : i32
    return %arg0, %c0_i32, %c0_i32_0 : i32, i32, i32
  }
  func.func @transform_1(%arg0: i32, %arg1: memref<2xi32, #tpu.memory_space<smem>>) -> (i32, i32, i32) {
    %c0_i32 = arith.constant 0 : i32
    %c0_i32_0 = arith.constant 0 : i32
    %c0_i32_1 = arith.constant 0 : i32
    %c0_i32_2 = arith.constant 0 : i32
    return %c0_i32, %c0_i32_0, %c0_i32_1 : i32, i32, i32
  }
  func.func @transform_2(%arg0: i32, %arg1: memref<2xi32, #tpu.memory_space<smem>>) -> (i32, i32, i32) {
    %c0_i32 = arith.constant 0 : i32
    %c0_i32_0 = arith.constant 0 : i32
    %c0_i32_1 = arith.constant 0 : i32
    %c0_i32_2 = arith.constant 0 : i32
    return %c0_i32, %c0_i32_0, %c0_i32_1 : i32, i32, i32
  }
  func.func @transform_3(%arg0: i32, %arg1: memref<2xi32, #tpu.memory_space<smem>>) -> (i32, i32, i32) {
    %c0_i32 = arith.constant 0 : i32
    %c0_i32_0 = arith.constant 0 : i32
    %c0_i32_1 = arith.constant 0 : i32
    %c0_i32_2 = arith.constant 0 : i32
    return %c0_i32, %c0_i32_0, %c0_i32_1 : i32, i32, i32
  }
  func.func @transform_4(%arg0: i32, %arg1: memref<2xi32, #tpu.memory_space<smem>>) -> (i32, i32, i32) {
    %c0_i32 = arith.constant 0 : i32
    %c0_i32_0 = arith.constant 0 : i32
    %c0_i32_1 = arith.constant 0 : i32
    %c0_i32_2 = arith.constant 0 : i32
    return %c0_i32, %c0_i32_0, %c0_i32_1 : i32, i32, i32
  }
  func.func @transform_5(%arg0: i32, %arg1: memref<2xi32, #tpu.memory_space<smem>>) -> (i32, i32, i32) {
    %c0_i32 = arith.constant 0 : i32
    %c0_i32_0 = arith.constant 0 : i32
    %c0_i32_1 = arith.constant 0 : i32
    return %arg0, %c0_i32, %c0_i32_0 : i32, i32, i32
  }
}

module attributes {stable_mosaic.version = 11 : i64} {
  func.func @scatter_logsoftmax_kernel(%arg0: i32, %arg1: memref<2x2xf32, #tpu.memory_space<vmem>>, %arg2: memref<2x2xi32, #tpu.memory_space<vmem>>, %arg3: memref<2x10xf32, #tpu.memory_space<vmem>>) attributes {dimension_semantics = [#tpu.dimension_semantics<arbitrary>], iteration_bounds = array<i64: 1>, scalar_prefetch = 0 : i64, scratch_operands = 0 : i64, tpu.core_type = #tpu.core_type<tc>, window_params = [{pipeline_mode = #tpu.pipeline_mode<synchronous>, transform_indices = @transform_0, window_bounds = array<i64: 2, 2>}, {pipeline_mode = #tpu.pipeline_mode<synchronous>, transform_indices = @transform_1, window_bounds = array<i64: 2, 2>}, {pipeline_mode = #tpu.pipeline_mode<synchronous>, transform_indices = @transform_2, window_bounds = array<i64: 2, 10>}]} {
    %c0 = arith.constant 0 : index
    %c0_0 = arith.constant 0 : index
    %0 = vector.load %arg1[%c0, %c0_0] : memref<2x2xf32, #tpu.memory_space<vmem>>, vector<2x2xf32>
    %c0_1 = arith.constant 0 : index
    %c0_2 = arith.constant 0 : index
    %1 = vector.load %arg2[%c0_1, %c0_2] : memref<2x2xi32, #tpu.memory_space<vmem>>, vector<2x2xi32>
    %2 = tpu.iota {dimensions = array<i32: 1>} : vector<2x10xi32>
    %cst = arith.constant -1.000000e+02 : f32
    %3 = vector.broadcast %cst : f32 to vector<2x10xf32>
    %4 = vector.extract_strided_slice %1 {offsets = [0, 0], sizes = [2, 1], strides = [1, 1]} : vector<2x2xi32> to vector<2x1xi32>
    %5 = vector.broadcast %4 : vector<2x1xi32> to vector<2x10xi32>
    %6 = arith.cmpi eq, %2, %5 : vector<2x10xi32>
    %7 = vector.extract_strided_slice %0 {offsets = [0, 0], sizes = [2, 1], strides = [1, 1]} : vector<2x2xf32> to vector<2x1xf32>
    %8 = vector.shape_cast %7 : vector<2x1xf32> to vector<2x1xf32>
    %9 = vector.broadcast %8 : vector<2x1xf32> to vector<2x10xf32>
    %10 = arith.select %6, %9, %3 : vector<2x10xi1>, vector<2x10xf32>
    %11 = vector.extract_strided_slice %1 {offsets = [0, 1], sizes = [2, 1], strides = [1, 1]} : vector<2x2xi32> to vector<2x1xi32>
    %12 = vector.broadcast %11 : vector<2x1xi32> to vector<2x10xi32>
    %13 = arith.cmpi eq, %2, %12 : vector<2x10xi32>
    %14 = vector.extract_strided_slice %0 {offsets = [0, 1], sizes = [2, 1], strides = [1, 1]} : vector<2x2xf32> to vector<2x1xf32>
    %15 = vector.shape_cast %14 : vector<2x1xf32> to vector<2x1xf32>
    %16 = vector.broadcast %15 : vector<2x1xf32> to vector<2x10xf32>
    %17 = arith.select %13, %16, %10 : vector<2x10xi1>, vector<2x10xf32>
    %cst_3 = arith.constant dense<0xFF800000> : vector<2xf32>
    %18 = vector.multi_reduction <maximumf>, %17, %cst_3 [1] : vector<2x10xf32> to vector<2xf32>
    %19 = vector.shape_cast %18 : vector<2xf32> to vector<2x1xf32>
    %20 = vector.broadcast %19 : vector<2x1xf32> to vector<2x10xf32>
    %21 = arith.subf %17, %20 : vector<2x10xf32>
    %22 = math.exp %21 : vector<2x10xf32>
    %cst_4 = arith.constant dense<0.000000e+00> : vector<2xf32>
    %23 = vector.multi_reduction <add>, %22, %cst_4 [1] : vector<2x10xf32> to vector<2xf32>
    %24 = vector.shape_cast %23 : vector<2xf32> to vector<2x1xf32>
    %25 = math.log %24 : vector<2x1xf32>
    %26 = vector.broadcast %25 : vector<2x1xf32> to vector<2x10xf32>
    %27 = arith.subf %21, %26 : vector<2x10xf32>
    %c0_5 = arith.constant 0 : index
    %c0_6 = arith.constant 0 : index
    %28 = vector.load %arg3[%c0_5, %c0_6] : memref<2x10xf32, #tpu.memory_space<vmem>>, vector<2x10xf32>
    tpu.vector_store %arg3[%c0_5, %c0_6], %27 {strides = array<i32>} : memref<2x10xf32, #tpu.memory_space<vmem>>, vector<2x10xf32>,
    return
  }
  func.func @transform_0(%arg0: i32) -> (i32, i32) {
    %c0_i32 = arith.constant 0 : i32
    %c0_i32_0 = arith.constant 0 : i32
    %c0_i32_1 = arith.constant 0 : i32
    return %c0_i32, %c0_i32_0 : i32, i32
  }
  func.func @transform_1(%arg0: i32) -> (i32, i32) {
    %c0_i32 = arith.constant 0 : i32
    %c0_i32_0 = arith.constant 0 : i32
    %c0_i32_1 = arith.constant 0 : i32
    return %c0_i32, %c0_i32_0 : i32, i32
  }
  func.func @transform_2(%arg0: i32) -> (i32, i32) {
    %c0_i32 = arith.constant 0 : i32
    %c0_i32_0 = arith.constant 0 : i32
    %c0_i32_1 = arith.constant 0 : i32
    return %c0_i32, %c0_i32_0 : i32, i32
  }
}

</mosaic_0001>

<llo_original>
// kernel: two_stage_forward.4
$region0: #{two_stage_forward.4}
  #allocation0 [shape = 'u32[]', space=smem, size = 0x4, offset = 0x4, fixed_abs, tag = 'smem constant byte address 0x4 - core index']
  #allocation1 [shape = 'u32[144,128]{1,0:T(1,128)}', space=vmem, size = 0x12000, scoped, tag = 'internal scratch']
  #allocation2 [shape = 's32[1]{0}', space=sflag, size = 0x4, scoped, tag = 'scoped memory for two_stage_forward.4']
  #allocation3 [shape = 'u8[512]{0}', space=smem, size = 0x200, scoped, tag = 'prefetched SMEM operand 0']
  %s0 = inlined_call_operand.vmem [shape: s32[2], index: 0, kind: input, shape index: {}]
  %s1 = inlined_call_operand.vmem [shape: f32[2,1,128], index: 1, kind: input, shape index: {}]
  %s2 = inlined_call_operand.vmem [shape: f32[45,128,240], index: 2, kind: input, shape index: {}]
  %s3 = inlined_call_operand.vmem [shape: f32[45,1,240], index: 3, kind: input, shape index: {}]
  %s4 = inlined_call_operand.vmem [shape: f32[45,60,2], index: 4, kind: input, shape index: {}]
  %s5 = inlined_call_operand.vmem [shape: f32[45,1,2], index: 5, kind: input, shape index: {}]
  %s6 = inlined_call_operand.vmem [shape: f32[2,1,2], index: 6, kind: output, shape index: {}]
  %s7 = sld [smem:[#allocation0]]
  $region53: #{two_stage_forward.4} parent=0
    _
  %s9 = ssub.s32 1, %s7
  %s10 = scalar_select 0, %s9, %s7
  %s11 = sshll.u32 %s0, 4
  %s12 = int_to_ptr.vmem [resolvable:$true] %s11
  %14 = dma.vmem_to_smem %s12, 16, [#allocation3], [#allocation2]
  %15 = dma.done [#allocation2], 16
  %16 = sfence
  loop: start=0, step=1, limit=4
  $region2: #{two_stage_forward.4} parent=0 // loop_pre_header
    _
  $region3: #{two_stage_forward.4} parent=0 // loop_header
    %s18 = sphi 0, %s22
    %p19 = scmp.ge.s32.totalorder %s18, 4
    %s28 = sphi 0, %s30
    %s31 = sphi 0, %s28
    %s32 = sphi 0, %s31
    %s48 = sphi 0, %s32
    %s52 = sphi 0, %s52
    %s54 = sphi 0, %s52
    %s55 = sphi 0, %s54
    %s69 = sphi 0, %s55
    %s73 = sphi 0, %s73
    %s75 = sphi 0, %s73
    %s76 = sphi 0, %s75
    %s90 = sphi 0, %s76
    %s94 = sphi 0, %s94
    %s96 = sphi 0, %s94
    %s97 = sphi 0, %s96
    %s111 = sphi 0, %s97
    %s115 = sphi 0, %s115
    %s117 = sphi 0, %s115
    %s118 = sphi 0, %s117
    %s132 = sphi 0, %s118
    %s138 = sphi 0, %s140
    %s141 = sphi 0, %s138
    %s142 = sphi 0, %s141
    %s158 = sphi 0, %s142
  $region4: #{two_stage_forward.4} parent=0 // loop_header_branch
    %21 = sbr.rel (%p19) target = $region8
  $region5: #{two_stage_forward.4} parent=0 // loop_body
    %s23 = ssub.s32 %s18, 1
    %s24 = ssub.s32 %s18, 2
    %s25 = sadd.s32 %s18, 1
    %s26 = ssub.s32 %s18, %s25
    %p27 = scmp.eq.s32.totalorder %s26, 0
    %s29 = sadd.s32 %s28, 1
    %s30 = scalar_select %p27, %s28, %s29
    %p33 = pneg %p27
    %p34 = scmp.eq.s32.totalorder %s18, 1
    %p35 = por %p33, %p34
    %p36 = scmp.ne.s32.totalorder %s28, %s31
    %p37 = scmp.eq.s32.totalorder %s18, 0
    %p38 = por %p36, %p37
    %p39 = scmp.ne.s32.totalorder %s28, %s31
    %p40 = scmp.eq.s32.totalorder %s23, 1
    %p41 = por %p39, %p40
    %p42 = scmp.ne.s32.totalorder %s31, %s32
    %p43 = scmp.eq.s32.totalorder %s23, 0
    %p44 = por %p42, %p43
    %p45 = scmp.ne.s32.totalorder %s31, %s32
    %p46 = scmp.eq.s32.totalorder %s24, 1
    %p47 = por %p45, %p46
    %p49 = scmp.ne.s32.totalorder %s32, %s48
    %p50 = scmp.eq.s32.totalorder %s24, 0
    %p51 = por %p49, %p50
    %s53 = sadd.s32 %s52, 1
    %p56 = scmp.eq.s32.totalorder %s18, 1
    %p57 = scmp.ne.s32.totalorder %s52, %s54
    %p58 = scmp.eq.s32.totalorder %s18, 0
    %p59 = por %p57, %p58
    %p60 = scmp.ne.s32.totalorder %s52, %s54
    %p61 = scmp.eq.s32.totalorder %s23, 1
    %p62 = por %p60, %p61
    %p63 = scmp.ne.s32.totalorder %s54, %s55
    %p64 = scmp.eq.s32.totalorder %s23, 0
    %p65 = por %p63, %p64
    %p66 = scmp.ne.s32.totalorder %s54, %s55
    %p67 = scmp.eq.s32.totalorder %s24, 1
    %p68 = por %p66, %p67
    %p70 = scmp.ne.s32.totalorder %s55, %s69
    %p71 = scmp.eq.s32.totalorder %s24, 0
    %p72 = por %p70, %p71
    %s74 = sadd.s32 %s73, 1
    %p77 = scmp.eq.s32.totalorder %s18, 1
    %p78 = scmp.ne.s32.totalorder %s73, %s75
    %p79 = scmp.eq.s32.totalorder %s18, 0
    %p80 = por %p78, %p79
    %p81 = scmp.ne.s32.totalorder %s73, %s75
    %p82 = scmp.eq.s32.totalorder %s23, 1
    %p83 = por %p81, %p82
    %p84 = scmp.ne.s32.totalorder %s75, %s76
    %p85 = scmp.eq.s32.totalorder %s23, 0
    %p86 = por %p84, %p85
    %p87 = scmp.ne.s32.totalorder %s75, %s76
    %p88 = scmp.eq.s32.totalorder %s24, 1
    %p89 = por %p87, %p88
    %p91 = scmp.ne.s32.totalorder %s76, %s90
    %p92 = scmp.eq.s32.totalorder %s24, 0
    %p93 = por %p91, %p92
    %s95 = sadd.s32 %s94, 1
    %p98 = scmp.eq.s32.totalorder %s18, 1
    %p99 = scmp.ne.s32.totalorder %s94, %s96
    %p100 = scmp.eq.s32.totalorder %s18, 0
    %p101 = por %p99, %p100
    %p102 = scmp.ne.s32.totalorder %s94, %s96
    %p103 = scmp.eq.s32.totalorder %s23, 1
    %p104 = por %p102, %p103
    %p105 = scmp.ne.s32.totalorder %s96, %s97
    %p106 = scmp.eq.s32.totalorder %s23, 0
    %p107 = por %p105, %p106
    %p108 = scmp.ne.s32.totalorder %s96, %s97
    %p109 = scmp.eq.s32.totalorder %s24, 1
    %p110 = por %p108, %p109
    %p112 = scmp.ne.s32.totalorder %s97, %s111
    %p113 = scmp.eq.s32.totalorder %s24, 0
    %p114 = por %p112, %p113
    %s116 = sadd.s32 %s115, 1
    %p119 = scmp.eq.s32.totalorder %s18, 1
    %p120 = scmp.ne.s32.totalorder %s115, %s117
    %p121 = scmp.eq.s32.totalorder %s18, 0
    %p122 = por %p120, %p121
    %p123 = scmp.ne.s32.totalorder %s115, %s117
    %p124 = scmp.eq.s32.totalorder %s23, 1
    %p125 = por %p123, %p124
    %p126 = scmp.ne.s32.totalorder %s117, %s118
    %p127 = scmp.eq.s32.totalorder %s23, 0
    %p128 = por %p126, %p127
    %p129 = scmp.ne.s32.totalorder %s117, %s118
    %p130 = scmp.eq.s32.totalorder %s24, 1
    %p131 = por %p129, %p130
    %p133 = scmp.ne.s32.totalorder %s118, %s132
    %p134 = scmp.eq.s32.totalorder %s24, 0
    %p135 = por %p133, %p134
    %s136 = ssub.s32 %s18, %s25
    %p137 = scmp.eq.s32.totalorder %s136, 0
    %s139 = sadd.s32 %s138, 1
    %s140 = scalar_select %p137, %s138, %s139
    %p143 = pneg %p137
    %p144 = scmp.eq.s32.totalorder %s18, 1
    %p145 = por %p143, %p144
    %p146 = scmp.ne.s32.totalorder %s138, %s141
    %p147 = scmp.eq.s32.totalorder %s18, 0
    %p148 = por %p146, %p147
    %p149 = scmp.ne.s32.totalorder %s138, %s141
    %p150 = scmp.eq.s32.totalorder %s23, 1
    %p151 = por %p149, %p150
    %p152 = scmp.ne.s32.totalorder %s141, %s142
    %p153 = scmp.eq.s32.totalorder %s23, 0
    %p154 = por %p152, %p153
    %p155 = scmp.ne.s32.totalorder %s141, %s142
    %p156 = scmp.eq.s32.totalorder %s24, 1
    %p157 = por %p155, %p156
    %p159 = scmp.ne.s32.totalorder %s142, %s158
    %p160 = scmp.eq.s32.totalorder %s24, 0
    %p161 = por %p159, %p160
    %p162 = scmp.le.s32.totalorder 1, %s18
    %p163 = scmp.lt.s32.totalorder %s18, 3
    %p164 = pnand %p162, %p163
    %p165 = pneg %p164
    // Predicated region
    $region9: #{two_stage_forward.4} parent=5 // pred_check
      _
    $region10: #{two_stage_forward.4} parent=5 // pred_check_branch
      %167 = sbr.rel (%p164) target = $region12
    $region11: #{two_stage_forward.4} parent=5 // pred_region
      %s168 = ssub.s32 %s18, 1
      // Predicated region
      $region13: #{two_stage_forward.4} parent=11 // pred_check
        %p169 = pneg %p65
      $region14: #{two_stage_forward.4} parent=11 // pred_check_branch
        %171 = sbr.rel (%p169) target = $region16
      $region15: #{two_stage_forward.4} parent=11 // pred_region
        _
      $region16: #{two_stage_forward.4} parent=11 // pred_fallthru
        _
      // Predicated region
      $region17: #{two_stage_forward.4} parent=11 // pred_check
        %p172 = pneg %p86
      $region18: #{two_stage_forward.4} parent=11 // pred_check_branch
        %174 = sbr.rel (%p172) target = $region20
      $region19: #{two_stage_forward.4} parent=11 // pred_region
        _
      $region20: #{two_stage_forward.4} parent=11 // pred_fallthru
        _
      // Predicated region
      $region21: #{two_stage_forward.4} parent=11 // pred_check
        %p175 = pneg %p107
      $region22: #{two_stage_forward.4} parent=11 // pred_check_branch
        %177 = sbr.rel (%p175) target = $region24
      $region23: #{two_stage_forward.4} parent=11 // pred_region
        _
      $region24: #{two_stage_forward.4} parent=11 // pred_fallthru
        _
      // Predicated region
      $region25: #{two_stage_forward.4} parent=11 // pred_check
        %p178 = pneg %p128
      $region26: #{two_stage_forward.4} parent=11 // pred_check_branch
        %180 = sbr.rel (%p178) target = $region28
      $region27: #{two_stage_forward.4} parent=11 // pred_region
        _
      $region28: #{two_stage_forward.4} parent=11 // pred_fallthru
        _
    $region12: #{two_stage_forward.4} parent=5 // pred_fallthru
      _
    %p181 = scmp.lt.s32.totalorder %s18, 2
    // Predicated region
    $region29: #{two_stage_forward.4} parent=5 // pred_check
      %p182 = pneg %p181
    $region30: #{two_stage_forward.4} parent=5 // pred_check_branch
      %184 = sbr.rel (%p182) target = $region32
    $region31: #{two_stage_forward.4} parent=5 // pred_region
      // Predicated region
      $region33: #{two_stage_forward.4} parent=31 // pred_check
        %p185 = pneg %p38
      $region34: #{two_stage_forward.4} parent=31 // pred_check_branch
        %187 = sbr.rel (%p185) target = $region36
      $region35: #{two_stage_forward.4} parent=31 // pred_region
        %p188 = scmp.lt.s32.totalorder %s18, 1
        %s189 = scalar_select %p188, %s18, 1
        %s190 = scalar_lea.vmem %s1, %s189
      $region36: #{two_stage_forward.4} parent=31 // pred_fallthru
        _
    $region32: #{two_stage_forward.4} parent=5 // pred_fallthru
      _
    %p191 = scmp.le.s32.totalorder 1, %s18
    %p192 = scmp.lt.s32.totalorder %s18, 3
    %p193 = pnand %p191, %p192
    %p194 = pneg %p193
    // Predicated region
    $region37: #{two_stage_forward.4} parent=5 // pred_check
      _
    $region38: #{two_stage_forward.4} parent=5 // pred_check_branch
      %196 = sbr.rel (%p193) target = $region40
    $region39: #{two_stage_forward.4} parent=5 // pred_region
      %s197 = ssub.s32 %s18, 1
      %p198 = scmp.lt.s32.totalorder %s23, 1
      %s199 = scalar_select %p198, %s23, 1
      %s200 = scalar_lea.vmem %s1, %s199
      %p201 = pneg %p44
      %p202 = pneg %p41
      %p203 = pneg %p65
      %p204 = pneg %p62
      %p205 = pneg %p86
      %p206 = pneg %p83
      %p207 = pneg %p107
      %p208 = pneg %p104
      %p209 = pneg %p128
      %p210 = pneg %p125
      %p211 = pneg %p154
      %p212 = pneg %p151
      %p213 = scmp.lt.s32.totalorder %s23, 1
      %s214 = scalar_select %p213, %s23, 1
      %s215 = scalar_lea.vmem %s6, %s214
      %p216 = scmp.lt.s32.totalorder %s23, 1
      %s217 = scalar_select %p216, %s23, 1
      %s218 = scalar_lea.vmem %s1, %s217
      %p219 = scmp.lt.s32.totalorder %s23, 1
      %s220 = scalar_select %p219, %s23, 1
      %s221 = scalar_lea.vmem %s6, %s220
      %s222 = sld [smem:[#allocation3 + %s23]]
      %v223 = vld [vmem:[%s218] sm:$0x1]
      %s224 = smul.u32 %s222, 32
      %s225 = smul.addr %s224, 8
      %s226 = scalar_lea.vmem %s2, %s225
      %v227 = vld [vmem:[%s226] sm:$0xff]
      %v228 = vld [vmem:[%s226 + $0x8] sm:$0xff]
      %v229 = vld [vmem:[%s226 + $0x10] sm:$0xff]
      %v230 = vld [vmem:[%s226 + $0x18] sm:$0xff]
      %v231 = vld [vmem:[%s226 + $0x20] sm:$0xff]
      %v232 = vld [vmem:[%s226 + $0x28] sm:$0xff]
      %v233 = vld [vmem:[%s226 + $0x30] sm:$0xff]
      %v234 = vld [vmem:[%s226 + $0x38] sm:$0xff]
      %v235 = vld [vmem:[%s226 + $0x40] sm:$0xff]
      %v236 = vld [vmem:[%s226 + $0x48] sm:$0xff]
      %v237 = vld [vmem:[%s226 + $0x50] sm:$0xff]
      %v238 = vld [vmem:[%s226 + $0x58] sm:$0xff]
      %v239 = vld [vmem:[%s226 + $0x60] sm:$0xff]
      %v240 = vld [vmem:[%s226 + $0x68] sm:$0xff]
      %v241 = vld [vmem:[%s226 + $0x70] sm:$0xff]
      %v242 = vld [vmem:[%s226 + $0x78] sm:$0xff]
      %v243 = vld [vmem:[%s226 + $0x80] sm:$0xff]
      %v244 = vld [vmem:[%s226 + $0x88] sm:$0xff]
      %v245 = vld [vmem:[%s226 + $0x90] sm:$0xff]
      %v246 = vld [vmem:[%s226 + $0x98] sm:$0xff]
      %v247 = vld [vmem:[%s226 + $0xa0] sm:$0xff]
      %v248 = vld [vmem:[%s226 + $0xa8] sm:$0xff]
      %v249 = vld [vmem:[%s226 + $0xb0] sm:$0xff]
      %v250 = vld [vmem:[%s226 + $0xb8] sm:$0xff]
      %v251 = vld [vmem:[%s226 + $0xc0] sm:$0xff]
      %v252 = vld [vmem:[%s226 + $0xc8] sm:$0xff]
      %v253 = vld [vmem:[%s226 + $0xd0] sm:$0xff]
      %v254 = vld [vmem:[%s226 + $0xd8] sm:$0xff]
      %v255 = vld [vmem:[%s226 + $0xe0] sm:$0xff]
      %v256 = vld [vmem:[%s226 + $0xe8] sm:$0xff]
      %v257 = vld [vmem:[%s226 + $0xf0] sm:$0xff]
      %v258 = vld [vmem:[%s226 + $0xf8] sm:$0xff]
      %s259 = smul.u32 %s222, 2
      %s260 = scalar_lea.vmem %s3, %s259
      %v261 = vld [vmem:[%s260] sm:$0x3]
      %v263 = vlaneseq
      %v264 = vshrl.u32 %v263, 7
      %v265 = vsub.s32 0, %v264
      %v266 = vrot.slane %v261, %v265
      %v267 = vlaneseq
      %v268 = vshrl.u32 %v267, 7
      %v269 = vsub.s32 1, %v268
      %v270 = vrot.slane %v261, %v269
      %273 = vmatprep.subr.mxu0 %v228
      %274 = vmatpush1.msra.mxu0 %v227
      %275 = vmatprep.subr.mxu0 %v230
      %276 = vmatpush1.msra.mxu0 %v229
      %277 = vmatprep.subr.mxu0 %v232
      %278 = vmatpush1.msra.mxu0 %v231
      %279 = vmatprep.subr.mxu0 %v234
      %280 = vmatpush1.msra.mxu0 %v233
      %281 = vmatprep.subr.mxu0 %v236
      %282 = vmatpush1.msra.mxu0 %v235
      %283 = vmatprep.subr.mxu0 %v238
      %284 = vmatpush1.msra.mxu0 %v237
      %285 = vmatprep.subr.mxu0 %v240
      %286 = vmatpush1.msra.mxu0 %v239
      %287 = vmatprep.subr.mxu0 %v242
      %288 = vmatpush1.msra.mxu0 %v241
      %289 = vmatprep.subr.mxu0 %v244
      %290 = vmatpush1.msra.mxu0 %v243
      %291 = vmatprep.subr.mxu0 %v246
      %292 = vmatpush1.msra.mxu0 %v245
      %293 = vmatprep.subr.mxu0 %v248
      %294 = vmatpush1.msra.mxu0 %v247
      %295 = vmatprep.subr.mxu0 %v250
      %296 = vmatpush1.msra.mxu0 %v249
      %297 = vmatprep.subr.mxu0 %v252
      %298 = vmatpush1.msra.mxu0 %v251
      %299 = vmatprep.subr.mxu0 %v254
      %300 = vmatpush1.msra.mxu0 %v253
      %301 = vmatprep.subr.mxu0 %v256
      %302 = vmatpush1.msra.mxu0 %v255
      %303 = vmatprep.subr.mxu0 %v258
      %304 = vmatpush1.msra.mxu0 %v257
      %305 = vmatprep.subr.mxu0 0.0
      %306 = vmatpush1.msra.mxu0 0.0
      %307 = vmatprep.subr.mxu0 0.0
      %308 = vmatpush1.msra.mxu0 0.0
      %309 = vmatprep.subr.mxu0 0.0
      %310 = vmatpush1.msra.mxu0 0.0
      %311 = vmatprep.subr.mxu0 0.0
      %312 = vmatpush1.msra.mxu0 0.0
      %313 = vmatprep.subr.mxu0 0.0
      %314 = vmatpush1.msra.mxu0 0.0
      %315 = vmatprep.subr.mxu0 0.0
      %316 = vmatpush1.msra.mxu0 0.0
      %317 = vmatprep.subr.mxu0 0.0
      %318 = vmatpush1.msra.mxu0 0.0
      %319 = vmatprep.subr.mxu0 0.0
      %320 = vmatpush1.msra.mxu0 0.0
      %321 = vmatprep.subr.mxu0 0.0
      %322 = vmatpush1.msra.mxu0 0.0
      %323 = vmatprep.subr.mxu0 0.0
      %324 = vmatpush1.msra.mxu0 0.0
      %325 = vmatprep.subr.mxu0 0.0
      %326 = vmatpush1.msra.mxu0 0.0
      %327 = vmatprep.subr.mxu0 0.0
      %328 = vmatpush1.msra.mxu0 0.0
      %329 = vmatprep.subr.mxu0 0.0
      %330 = vmatpush1.msra.mxu0 0.0
      %331 = vmatprep.subr.mxu0 0.0
      %332 = vmatpush1.msra.mxu0 0.0
      %333 = vmatprep.subr.mxu0 0.0
      %334 = vmatpush1.msra.mxu0 0.0
      %335 = vmatprep.subr.mxu0 0.0
      %336 = vmatpush1.msra.mxu0 0.0
      %337 = vmatprep.mubr.f32.mxu0 0.0
      %338 = vmatmul.mubr.f32.gmra.mrb[0].mxu0 %v223
      %v339 = vpop.f32.mrb[0].mxu0
      %v340 = vadd.f32 %v266, %v339
      %v341 = vpop.f32.mrb[0].mxu0
      %v342 = vadd.f32 %v270, %v341
      %343 = vdwg.mxu0
      %v344 = vmax.f32 %v340, 0.0
      %v345 = vmax.f32 %v342, 0.0
      %347 = vrot.lane.b32.xlu0 %v344, 68
      %v348 = vpop.permute.xlu0 %347
      %v350 = vmax.f32 %v344, %v348
      %352 = vrot.lane.b32.xlu0 %v345, 68
      %v353 = vpop.permute.xlu0 %352
      %v355 = vmax.f32 %v344, %v353
      %v356 = vmax.f32 %v345, %v353
      %359 = vrot.lane.b32.xlu0 %v355, 8
      %v360 = vpop.permute.xlu0 %359
      %361 = vrot.lane.b32.xlu0 %v356, 8
      %v362 = vpop.permute.xlu0 %361
      %vm363 = vcmask 64512
      %v364 = vsel %vm363, %v360, %v362
      %v366 = vmax.f32 %v350, %v364
      %s367 = smul.u32 %s222, 64
      %s368 = scalar_lea.vmem %s4, %s367
      %v369 = vld [vmem:[%s368] sm:$0xff]
      %v370 = vld [vmem:[%s368 + $0x8] sm:$0xff]
      %v371 = vld [vmem:[%s368 + $0x10] sm:$0xff]
      %v372 = vld [vmem:[%s368 + $0x18] sm:$0xff]
      %v373 = vld [vmem:[%s368 + $0x20] sm:$0xff]
      %v374 = vld [vmem:[%s368 + $0x28] sm:$0xff]
      %v375 = vld [vmem:[%s368 + $0x30] sm:$0xff]
      %v376 = vld [vmem:[%s368 + $0x38] sm:$0xf]
      %s377 = scalar_lea.vmem %s5, %s222
      %v378 = vld [vmem:[%s377] sm:$0x1]
      %vm379 = vcmask 490496
      %v381 = vsel %vm379, %v366, 0
      %vm383 = vcmask 1043456
      %v385 = vsel %vm383, %v376, 0
      %387 = vmatprep.subr.mxu0 0.0
      %388 = vmatpush1.msra.mxu0 %v369
      %389 = vmatprep.subr.mxu0 0.0
      %390 = vmatpush1.msra.mxu0 %v370
      %391 = vmatprep.subr.mxu0 0.0
      %392 = vmatpush1.msra.mxu0 %v371
      %393 = vmatprep.subr.mxu0 0.0
      %394 = vmatpush1.msra.mxu0 %v372
      %395 = vmatprep.subr.mxu0 0.0
      %396 = vmatpush1.msra.mxu0 %v373
      %397 = vmatprep.subr.mxu0 0.0
      %398 = vmatpush1.msra.mxu0 %v374
      %399 = vmatprep.subr.mxu0 0.0
      %400 = vmatpush1.msra.mxu0 %v375
      %401 = vmatprep.subr.mxu0 0.0
      %402 = vmatpush1.msra.mxu0 %v385
      %403 = vmatprep.subr.mxu0 0.0
      %404 = vmatpush1.msra.mxu0 0.0
      %405 = vmatprep.subr.mxu0 0.0
      %406 = vmatpush1.msra.mxu0 0.0
      %407 = vmatprep.subr.mxu0 0.0
      %408 = vmatpush1.msra.mxu0 0.0
      %409 = vmatprep.subr.mxu0 0.0
      %410 = vmatpush1.msra.mxu0 0.0
      %411 = vmatprep.subr.mxu0 0.0
      %412 = vmatpush1.msra.mxu0 0.0
      %413 = vmatprep.subr.mxu0 0.0
      %414 = vmatpush1.msra.mxu0 0.0
      %415 = vmatprep.subr.mxu0 0.0
      %416 = vmatpush1.msra.mxu0 0.0
      %417 = vmatprep.subr.mxu0 0.0
      %418 = vmatpush1.msra.mxu0 0.0
      %419 = vmatprep.subr.mxu0 0.0
      %420 = vmatpush1.msra.mxu0 0.0
      %421 = vmatprep.subr.mxu0 0.0
      %422 = vmatpush1.msra.mxu0 0.0
      %423 = vmatprep.subr.mxu0 0.0
      %424 = vmatpush1.msra.mxu0 0.0
      %425 = vmatprep.subr.mxu0 0.0
      %426 = vmatpush1.msra.mxu0 0.0
      %427 = vmatprep.subr.mxu0 0.0
      %428 = vmatpush1.msra.mxu0 0.0
      %429 = vmatprep.subr.mxu0 0.0
      %430 = vmatpush1.msra.mxu0 0.0
      %431 = vmatprep.subr.mxu0 0.0
      %432 = vmatpush1.msra.mxu0 0.0
      %433 = vmatprep.subr.mxu0 0.0
      %434 = vmatpush1.msra.mxu0 0.0
      %435 = vmatprep.subr.mxu0 0.0
      %436 = vmatpush1.msra.mxu0 0.0
      %437 = vmatprep.subr.mxu0 0.0
      %438 = vmatpush1.msra.mxu0 0.0
      %439 = vmatprep.subr.mxu0 0.0
      %440 = vmatpush1.msra.mxu0 0.0
      %441 = vmatprep.subr.mxu0 0.0
      %442 = vmatpush1.msra.mxu0 0.0
      %443 = vmatprep.subr.mxu0 0.0
      %444 = vmatpush1.msra.mxu0 0.0
      %445 = vmatprep.subr.mxu0 0.0
      %446 = vmatpush1.msra.mxu0 0.0
      %447 = vmatprep.subr.mxu0 0.0
      %448 = vmatpush1.msra.mxu0 0.0
      %449 = vmatprep.subr.mxu0 0.0
      %450 = vmatpush1.msra.mxu0 0.0
      %451 = vmatprep.mubr.f32.mxu0 0.0
      %452 = vmatmul.mubr.f32.gmra.mrb[0].mxu0 %v381
      %v453 = vpop.f32.mrb[0].mxu0
      %v454 = vadd.f32 %v378, %v453
      %v455 = vpop.f32.mrb[0].mxu0
      %456 = vdwg.mxu0
      %vm457 = vcmask 8192
      %458 = vst.msk [vmem:[%s221] sm:$0x1] %vm457, %v454
      %p459 = scmp.lt.s32.totalorder %s23, 1
      %s460 = scalar_select %p459, %s23, 1
      %s461 = scalar_lea.vmem %s6, %s460
      // Predicated region
      $region41: #{two_stage_forward.4} parent=39 // pred_check
        %p462 = pneg %p151
      $region42: #{two_stage_forward.4} parent=39 // pred_check_branch
        %464 = sbr.rel (%p462) target = $region44
      $region43: #{two_stage_forward.4} parent=39 // pred_region
        _
      $region44: #{two_stage_forward.4} parent=39 // pred_fallthru
        _
    $region40: #{two_stage_forward.4} parent=5 // pred_fallthru
      _
    %p465 = scmp.le.s32.totalorder 2, %s18
    // Predicated region
    $region45: #{two_stage_forward.4} parent=5 // pred_check
      %p466 = pneg %p465
    $region46: #{two_stage_forward.4} parent=5 // pred_check_branch
      %468 = sbr.rel (%p466) target = $region48
    $region47: #{two_stage_forward.4} parent=5 // pred_region
      %s469 = ssub.s32 %s18, 2
      // Predicated region
      $region49: #{two_stage_forward.4} parent=47 // pred_check
        %p470 = pneg %p157
      $region50: #{two_stage_forward.4} parent=47 // pred_check_branch
        %472 = sbr.rel (%p470) target = $region52
      $region51: #{two_stage_forward.4} parent=47 // pred_region
        %p473 = scmp.lt.s32.totalorder %s24, 1
        %s474 = scalar_select %p473, %s24, 1
        %s475 = scalar_lea.vmem %s6, %s474
      $region52: #{two_stage_forward.4} parent=47 // pred_fallthru
        _
    $region48: #{two_stage_forward.4} parent=5 // pred_fallthru
      _
  $region6: #{two_stage_forward.4} parent=0 // loop_footer
    %s22 = sadd.s32 1, %s18
  $region7: #{two_stage_forward.4} parent=0 // loop_footer_branch
    %17 = sbr.rel target = $region3
  $region8: #{two_stage_forward.4} parent=0 // loop_exit
    _

// kernel: two_stage_forward.3
$region0: #{two_stage_forward.3}
  #allocation0 [shape = 'u32[]', space=smem, size = 0x4, offset = 0x4, fixed_abs, tag = 'smem constant byte address 0x4 - core index']
  #allocation1 [shape = 'u32[144,128]{1,0:T(1,128)}', space=vmem, size = 0x12000, scoped, tag = 'internal scratch']
  %s0 = inlined_call_operand.vmem [shape: f32[8,784], index: 0, kind: input, shape index: {}]
  %s1 = inlined_call_operand.hbm [shape: f32[784,128], index: 1, kind: input, shape index: {}]
  %s2 = inlined_call_operand.hbm [shape: f32[128,1024], index: 2, kind: input, shape index: {}]
  %s3 = inlined_call_operand.hbm [shape: f32[1,1024], index: 3, kind: input, shape index: {}]
  %s4 = inlined_call_operand.vmem [shape: f32[256,10], index: 4, kind: input, shape index: {}]
  %s5 = inlined_call_operand.hbm [shape: f32[1,10], index: 5, kind: input, shape index: {}]
  %s6 = inlined_call_operand.vmem [shape: f32[8,10], index: 6, kind: output, shape index: {0}]
  %s7 = inlined_call_operand.vmem [shape: f32[8,10], index: 7, kind: output, shape index: {1}]
  %s8 = inlined_call_operand.vmem [shape: f32[8,128], index: 8, kind: output, shape index: {2}]
  %9 = xla_tuple %s6, %s7, %s8
  %s10 = sld [smem:[#allocation0]]
  $region66: #{two_stage_forward.3} parent=0
    _
  %s12 = ssub.s32 1, %s10
  %s13 = scalar_select 0, %s12, %s10
  $region1: #{two_stage_forward.3} parent=0
    #allocation2 [shape = 'u8[401408]{0}', space=vmem, size = 0x62000, scoped, tag = 'input window, operand 1, single buffered']
    #allocation3 [shape = 's32[1]{0}', space=sflag, size = 0x4, scoped, tag = 'scoped memory for two_stage_forward.3']
    #allocation4 [shape = 'u8[524288]{0}', space=vmem, size = 0x80000, scoped, tag = 'input window, operand 2, single buffered']
    #allocation5 [shape = 's32[1]{0}', space=sflag, size = 0x4, scoped, tag = 'scoped memory for two_stage_forward.3']
    #allocation6 [shape = 'u8[4096]{0}', space=vmem, size = 0x1000, scoped, tag = 'input window, operand 3, single buffered']
    #allocation7 [shape = 'u8[512]{0}', space=vmem, size = 0x400, scoped, tag = 'input window, operand 5, single buffered']
    #allocation8 [shape = 's32[1]{0}', space=sflag, size = 0x4, scoped, tag = 'scoped memory for two_stage_forward.3']
    %14 = vsyncpa [#allocation3], 0
    %15 = vsyncpa [#allocation5], 0
    %16 = vsyncpa [#allocation8], 0
    // Predicated region
    $region2: #{two_stage_forward.3} parent=1 // pred_check
      _
    $region3: #{two_stage_forward.3} parent=1 // pred_check_branch
      %18 = sbr.rel (0) target = $region5
    $region4: #{two_stage_forward.3} parent=1 // pred_region
      _
    $region5: #{two_stage_forward.3} parent=1 // pred_fallthru
      _
    // Predicated region
    $region6: #{two_stage_forward.3} parent=1 // pred_check
      _
    $region7: #{two_stage_forward.3} parent=1 // pred_check_branch
      %20 = sbr.rel (0) target = $region9
    $region8: #{two_stage_forward.3} parent=1 // pred_region
      %s22 = ssub.s32 12544, 12544
      %23 = vsyncadd [#allocation3], %s22
      %s24 = sshll.u32 [#allocation2], 4
      %s25 = int_to_ptr.vmem [resolvable:$true] %s24
      %30 = dma.hbm_to_vmem [thread:$0]  %s1, 12544, %s25, [#allocation3], 128, 128, 8
    $region9: #{two_stage_forward.3} parent=1 // pred_fallthru
      _
    // Predicated region
    $region10: #{two_stage_forward.3} parent=1 // pred_check
      _
    $region11: #{two_stage_forward.3} parent=1 // pred_check_branch
      %32 = sbr.rel (0) target = $region13
    $region12: #{two_stage_forward.3} parent=1 // pred_region
      %s34 = ssub.s32 16384, 16384
      %35 = vsyncadd [#allocation5], %s34
      %s36 = sshll.u32 [#allocation4], 4
      %s37 = int_to_ptr.vmem [resolvable:$true] %s36
      %42 = dma.hbm_to_vmem [thread:$0]  %s2, 16384, %s37, [#allocation5], 1024, 1024, 64
    $region13: #{two_stage_forward.3} parent=1 // pred_fallthru
      _
    // Predicated region
    $region14: #{two_stage_forward.3} parent=1 // pred_check
      _
    $region15: #{two_stage_forward.3} parent=1 // pred_check_branch
      %44 = sbr.rel (0) target = $region17
    $region16: #{two_stage_forward.3} parent=1 // pred_region
      %s46 = ssub.s32 128, 128
      %47 = vsyncadd [#allocation5], %s46
      %s49 = sshll.u32 [#allocation6], 4
      %s50 = int_to_ptr.vmem [resolvable:$true] %s49
      %52 = dma.hbm_to_vmem [thread:$0]  %s3, 128, %s50, [#allocation5]
    $region17: #{two_stage_forward.3} parent=1 // pred_fallthru
      _
    // Predicated region
    $region18: #{two_stage_forward.3} parent=1 // pred_check
      _
    $region19: #{two_stage_forward.3} parent=1 // pred_check_branch
      %54 = sbr.rel (0) target = $region21
    $region20: #{two_stage_forward.3} parent=1 // pred_region
      _
    $region21: #{two_stage_forward.3} parent=1 // pred_fallthru
      _
    // Predicated region
    $region22: #{two_stage_forward.3} parent=1 // pred_check
      _
    $region23: #{two_stage_forward.3} parent=1 // pred_check_branch
      %56 = sbr.rel (0) target = $region25
    $region24: #{two_stage_forward.3} parent=1 // pred_region
      %s58 = ssub.s32 16, 16
      %59 = vsyncadd [#allocation8], %s58
      %s61 = sshll.u32 [#allocation7], 4
      %s62 = int_to_ptr.vmem [resolvable:$true] %s61
      %64 = dma.hbm_to_vmem [thread:$0]  %s5, 16, %s62, [#allocation8]
    $region25: #{two_stage_forward.3} parent=1 // pred_fallthru
      _
    // Predicated region
    $region26: #{two_stage_forward.3} parent=1 // pred_check
      _
    $region27: #{two_stage_forward.3} parent=1 // pred_check_branch
      %66 = sbr.rel (0) target = $region29
    $region28: #{two_stage_forward.3} parent=1 // pred_region
      %67 = dma.done [#allocation3], 12544
    $region29: #{two_stage_forward.3} parent=1 // pred_fallthru
      _
    // Predicated region
    $region30: #{two_stage_forward.3} parent=1 // pred_check
      _
    $region31: #{two_stage_forward.3} parent=1 // pred_check_branch
      %69 = sbr.rel (0) target = $region33
    $region32: #{two_stage_forward.3} parent=1 // pred_region
      %70 = dma.done [#allocation5], 16384
    $region33: #{two_stage_forward.3} parent=1 // pred_fallthru
      _
    // Predicated region
    $region34: #{two_stage_forward.3} parent=1 // pred_check
      _
    $region35: #{two_stage_forward.3} parent=1 // pred_check_branch
      %72 = sbr.rel (0) target = $region37
    $region36: #{two_stage_forward.3} parent=1 // pred_region
      %73 = dma.done [#allocation5], 128
    $region37: #{two_stage_forward.3} parent=1 // pred_fallthru
      _
    // Predicated region
    $region38: #{two_stage_forward.3} parent=1 // pred_check
      _
    $region39: #{two_stage_forward.3} parent=1 // pred_check_branch
      %75 = sbr.rel (0) target = $region41
    $region40: #{two_stage_forward.3} parent=1 // pred_region
      %76 = dma.done [#allocation8], 16
    $region41: #{two_stage_forward.3} parent=1 // pred_fallthru
      _
    %v77 = vld [vmem:[%s0] sm:$0xff]
    %v78 = vld [vmem:[%s0 + $0x8] sm:$0xff]
    %v79 = vld [vmem:[%s0 + $0x10] sm:$0xff]
    %v80 = vld [vmem:[%s0 + $0x18] sm:$0xff]
    %v81 = vld [vmem:[%s0 + $0x20] sm:$0xff]
    %v82 = vld [vmem:[%s0 + $0x28] sm:$0xff]
    %v83 = vld [vmem:[%s0 + $0x30] sm:$0xff]
    %v84 = vld [vmem:[#allocation2] sm:$0xff]
    %v85 = vld [vmem:[#allocation2 + $0x8] sm:$0xff]
    %v86 = vld [vmem:[#allocation2 + $0x10] sm:$0xff]
    %v87 = vld [vmem:[#allocation2 + $0x18] sm:$0xff]
    %v88 = vld [vmem:[#allocation2 + $0x20] sm:$0xff]
    %v89 = vld [vmem:[#allocation2 + $0x28] sm:$0xff]
    %v90 = vld [vmem:[#allocation2 + $0x30] sm:$0xff]
    %v91 = vld [vmem:[#allocation2 + $0x38] sm:$0xff]
    %v92 = vld [vmem:[#allocation2 + $0x40] sm:$0xff]
    %v93 = vld [vmem:[#allocation2 + $0x48] sm:$0xff]
    %v94 = vld [vmem:[#allocation2 + $0x50] sm:$0xff]
    %v95 = vld [vmem:[#allocation2 + $0x58] sm:$0xff]
    %v96 = vld [vmem:[#allocation2 + $0x60] sm:$0xff]
    %v97 = vld [vmem:[#allocation2 + $0x68] sm:$0xff]
    %v98 = vld [vmem:[#allocation2 + $0x70] sm:$0xff]
    %v99 = vld [vmem:[#allocation2 + $0x78] sm:$0xff]
    %v100 = vld [vmem:[#allocation2 + $0x80] sm:$0xff]
    %v101 = vld [vmem:[#allocation2 + $0x88] sm:$0xff]
    %v102 = vld [vmem:[#allocation2 + $0x90] sm:$0xff]
    %v103 = vld [vmem:[#allocation2 + $0x98] sm:$0xff]
    %v104 = vld [vmem:[#allocation2 + $0xa0] sm:$0xff]
    %v105 = vld [vmem:[#allocation2 + $0xa8] sm:$0xff]
    %v106 = vld [vmem:[#allocation2 + $0xb0] sm:$0xff]
    %v107 = vld [vmem:[#allocation2 + $0xb8] sm:$0xff]
    %v108 = vld [vmem:[#allocation2 + $0xc0] sm:$0xff]
    %v109 = vld [vmem:[#allocation2 + $0xc8] sm:$0xff]
    %v110 = vld [vmem:[#allocation2 + $0xd0] sm:$0xff]
    %v111 = vld [vmem:[#allocation2 + $0xd8] sm:$0xff]
    %v112 = vld [vmem:[#allocation2 + $0xe0] sm:$0xff]
    %v113 = vld [vmem:[#allocation2 + $0xe8] sm:$0xff]
    %v114 = vld [vmem:[#allocation2 + $0xf0] sm:$0xff]
    %v115 = vld [vmem:[#allocation2 + $0xf8] sm:$0xff]
    %v116 = vld [vmem:[#allocation2 + $0x100] sm:$0xff]
    %v117 = vld [vmem:[#allocation2 + $0x108] sm:$0xff]
    %v118 = vld [vmem:[#allocation2 + $0x110] sm:$0xff]
    %v119 = vld [vmem:[#allocation2 + $0x118] sm:$0xff]
    %v120 = vld [vmem:[#allocation2 + $0x120] sm:$0xff]
    %v121 = vld [vmem:[#allocation2 + $0x128] sm:$0xff]
    %v122 = vld [vmem:[#allocation2 + $0x130] sm:$0xff]
    %v123 = vld [vmem:[#allocation2 + $0x138] sm:$0xff]
    %v124 = vld [vmem:[#allocation2 + $0x140] sm:$0xff]
    %v125 = vld [vmem:[#allocation2 + $0x148] sm:$0xff]
    %v126 = vld [vmem:[#allocation2 + $0x150] sm:$0xff]
    %v127 = vld [vmem:[#allocation2 + $0x158] sm:$0xff]
    %v128 = vld [vmem:[#allocation2 + $0x160] sm:$0xff]
    %v129 = vld [vmem:[#allocation2 + $0x168] sm:$0xff]
    %v130 = vld [vmem:[#allocation2 + $0x170] sm:$0xff]
    %v131 = vld [vmem:[#allocation2 + $0x178] sm:$0xff]
    %v132 = vld [vmem:[#allocation2 + $0x180] sm:$0xff]
    %v133 = vld [vmem:[#allocation2 + $0x188] sm:$0xff]
    %v134 = vld [vmem:[#allocation2 + $0x190] sm:$0xff]
    %v135 = vld [vmem:[#allocation2 + $0x198] sm:$0xff]
    %v136 = vld [vmem:[#allocation2 + $0x1a0] sm:$0xff]
    %v137 = vld [vmem:[#allocation2 + $0x1a8] sm:$0xff]
    %v138 = vld [vmem:[#allocation2 + $0x1b0] sm:$0xff]
    %v139 = vld [vmem:[#allocation2 + $0x1b8] sm:$0xff]
    %v140 = vld [vmem:[#allocation2 + $0x1c0] sm:$0xff]
    %v141 = vld [vmem:[#allocation2 + $0x1c8] sm:$0xff]
    %v142 = vld [vmem:[#allocation2 + $0x1d0] sm:$0xff]
    %v143 = vld [vmem:[#allocation2 + $0x1d8] sm:$0xff]
    %v144 = vld [vmem:[#allocation2 + $0x1e0] sm:$0xff]
    %v145 = vld [vmem:[#allocation2 + $0x1e8] sm:$0xff]
    %v146 = vld [vmem:[#allocation2 + $0x1f0] sm:$0xff]
    %v147 = vld [vmem:[#allocation2 + $0x1f8] sm:$0xff]
    %v148 = vld [vmem:[#allocation2 + $0x200] sm:$0xff]
    %v149 = vld [vmem:[#allocation2 + $0x208] sm:$0xff]
    %v150 = vld [vmem:[#allocation2 + $0x210] sm:$0xff]
    %v151 = vld [vmem:[#allocation2 + $0x218] sm:$0xff]
    %v152 = vld [vmem:[#allocation2 + $0x220] sm:$0xff]
    %v153 = vld [vmem:[#allocation2 + $0x228] sm:$0xff]
    %v154 = vld [vmem:[#allocation2 + $0x230] sm:$0xff]
    %v155 = vld [vmem:[#allocation2 + $0x238] sm:$0xff]
    %v156 = vld [vmem:[#allocation2 + $0x240] sm:$0xff]
    %v157 = vld [vmem:[#allocation2 + $0x248] sm:$0xff]
    %v158 = vld [vmem:[#allocation2 + $0x250] sm:$0xff]
    %v159 = vld [vmem:[#allocation2 + $0x258] sm:$0xff]
    %v160 = vld [vmem:[#allocation2 + $0x260] sm:$0xff]
    %v161 = vld [vmem:[#allocation2 + $0x268] sm:$0xff]
    %v162 = vld [vmem:[#allocation2 + $0x270] sm:$0xff]
    %v163 = vld [vmem:[#allocation2 + $0x278] sm:$0xff]
    %v164 = vld [vmem:[#allocation2 + $0x280] sm:$0xff]
    %v165 = vld [vmem:[#allocation2 + $0x288] sm:$0xff]
    %v166 = vld [vmem:[#allocation2 + $0x290] sm:$0xff]
    %v167 = vld [vmem:[#allocation2 + $0x298] sm:$0xff]
    %v168 = vld [vmem:[#allocation2 + $0x2a0] sm:$0xff]
    %v169 = vld [vmem:[#allocation2 + $0x2a8] sm:$0xff]
    %v170 = vld [vmem:[#allocation2 + $0x2b0] sm:$0xff]
    %v171 = vld [vmem:[#allocation2 + $0x2b8] sm:$0xff]
    %v172 = vld [vmem:[#allocation2 + $0x2c0] sm:$0xff]
    %v173 = vld [vmem:[#allocation2 + $0x2c8] sm:$0xff]
    %v174 = vld [vmem:[#allocation2 + $0x2d0] sm:$0xff]
    %v175 = vld [vmem:[#allocation2 + $0x2d8] sm:$0xff]
    %v176 = vld [vmem:[#allocation2 + $0x2e0] sm:$0xff]
    %v177 = vld [vmem:[#allocation2 + $0x2e8] sm:$0xff]
    %v178 = vld [vmem:[#allocation2 + $0x2f0] sm:$0xff]
    %v179 = vld [vmem:[#allocation2 + $0x2f8] sm:$0xff]
    %v180 = vld [vmem:[#allocation2 + $0x300] sm:$0xff]
    %v181 = vld [vmem:[#allocation2 + $0x308] sm:$0xff]
    %vm182 = vcmask 130048
    %v184 = vsel %vm182, %v83, 0
    %186 = vmatprep.subr.mxu0 0.0
    %187 = vmatpush1.msra.mxu0 %v84
    %188 = vmatprep.subr.mxu0 0.0
    %189 = vmatpush1.msra.mxu0 %v85
    %190 = vmatprep.subr.mxu0 0.0
    %191 = vmatpush1.msra.mxu0 %v86
    %192 = vmatprep.subr.mxu0 0.0
    %193 = vmatpush1.msra.mxu0 %v87
    %194 = vmatprep.subr.mxu0 0.0
    %195 = vmatpush1.msra.mxu0 %v88
    %196 = vmatprep.subr.mxu0 0.0
    %197 = vmatpush1.msra.mxu0 %v89
    %198 = vmatprep.subr.mxu0 0.0
    %199 = vmatpush1.msra.mxu0 %v90
    %200 = vmatprep.subr.mxu0 0.0
    %201 = vmatpush1.msra.mxu0 %v91
    %202 = vmatprep.subr.mxu0 0.0
    %203 = vmatpush1.msra.mxu0 %v92
    %204 = vmatprep.subr.mxu0 0.0
    %205 = vmatpush1.msra.mxu0 %v93
    %206 = vmatprep.subr.mxu0 0.0
    %207 = vmatpush1.msra.mxu0 %v94
    %208 = vmatprep.subr.mxu0 0.0
    %209 = vmatpush1.msra.mxu0 %v95
    %210 = vmatprep.subr.mxu0 0.0
    %211 = vmatpush1.msra.mxu0 %v96
    %212 = vmatprep.subr.mxu0 0.0
    %213 = vmatpush1.msra.mxu0 %v97
    %214 = vmatprep.subr.mxu0 0.0
    %215 = vmatpush1.msra.mxu0 %v98
    %216 = vmatprep.subr.mxu0 0.0
    %217 = vmatpush1.msra.mxu0 %v99
    %218 = vmatprep.subr.mxu0 0.0
    %219 = vmatpush1.msra.mxu0 %v100
    %220 = vmatprep.subr.mxu0 0.0
    %221 = vmatpush1.msra.mxu0 %v101
    %222 = vmatprep.subr.mxu0 0.0
    %223 = vmatpush1.msra.mxu0 %v102
    %224 = vmatprep.subr.mxu0 0.0
    %225 = vmatpush1.msra.mxu0 %v103
    %226 = vmatprep.subr.mxu0 0.0
    %227 = vmatpush1.msra.mxu0 %v104
    %228 = vmatprep.subr.mxu0 0.0
    %229 = vmatpush1.msra.mxu0 %v105
    %230 = vmatprep.subr.mxu0 0.0
    %231 = vmatpush1.msra.mxu0 %v106
    %232 = vmatprep.subr.mxu0 0.0
    %233 = vmatpush1.msra.mxu0 %v107
    %234 = vmatprep.subr.mxu0 0.0
    %235 = vmatpush1.msra.mxu0 %v108
    %236 = vmatprep.subr.mxu0 0.0
    %237 = vmatpush1.msra.mxu0 %v109
    %238 = vmatprep.subr.mxu0 0.0
    %239 = vmatpush1.msra.mxu0 %v110
    %240 = vmatprep.subr.mxu0 0.0
    %241 = vmatpush1.msra.mxu0 %v111
    %242 = vmatprep.subr.mxu0 0.0
    %243 = vmatpush1.msra.mxu0 %v112
    %244 = vmatprep.subr.mxu0 0.0
    %245 = vmatpush1.msra.mxu0 %v113
    %246 = vmatprep.subr.mxu0 0.0
    %247 = vmatpush1.msra.mxu0 %v114
    %248 = vmatprep.subr.mxu0 0.0
    %249 = vmatpush1.msra.mxu0 %v115
    %250 = vmatprep.mubr.f32.mxu0 %v78
    %251 = vmatmul.mubr.f32.gmra.mrb[0].mxu0 %v77
    %v252 = vpop.f32.mrb[0].mxu0
    %v253 = vadd.f32 0.0, %v252
    %v254 = vpop.f32.mrb[0].mxu0
    %255 = vdwg.mxu0
    %256 = vmatprep.subr.mxu0 0.0
    %257 = vmatpush1.msra.mxu0 %v116
    %258 = vmatprep.subr.mxu0 0.0
    %259 = vmatpush1.msra.mxu0 %v117
    %260 = vmatprep.subr.mxu0 0.0
    %261 = vmatpush1.msra.mxu0 %v118
    %262 = vmatprep.subr.mxu0 0.0
    %263 = vmatpush1.msra.mxu0 %v119
    %264 = vmatprep.subr.mxu0 0.0
    %265 = vmatpush1.msra.mxu0 %v120
    %266 = vmatprep.subr.mxu0 0.0
    %267 = vmatpush1.msra.mxu0 %v121
    %268 = vmatprep.subr.mxu0 0.0
    %269 = vmatpush1.msra.mxu0 %v122
    %270 = vmatprep.subr.mxu0 0.0
    %271 = vmatpush1.msra.mxu0 %v123
    %272 = vmatprep.subr.mxu0 0.0
    %273 = vmatpush1.msra.mxu0 %v124
    %274 = vmatprep.subr.mxu0 0.0
    %275 = vmatpush1.msra.mxu0 %v125
    %276 = vmatprep.subr.mxu0 0.0
    %277 = vmatpush1.msra.mxu0 %v126
    %278 = vmatprep.subr.mxu0 0.0
    %279 = vmatpush1.msra.mxu0 %v127
    %280 = vmatprep.subr.mxu0 0.0
    %281 = vmatpush1.msra.mxu0 %v128
    %282 = vmatprep.subr.mxu0 0.0
    %283 = vmatpush1.msra.mxu0 %v129
    %284 = vmatprep.subr.mxu0 0.0
    %285 = vmatpush1.msra.mxu0 %v130
    %286 = vmatprep.subr.mxu0 0.0
    %287 = vmatpush1.msra.mxu0 %v131
    %288 = vmatprep.subr.mxu0 0.0
    %289 = vmatpush1.msra.mxu0 %v132
    %290 = vmatprep.subr.mxu0 0.0
    %291 = vmatpush1.msra.mxu0 %v133
    %292 = vmatprep.subr.mxu0 0.0
    %293 = vmatpush1.msra.mxu0 %v134
    %294 = vmatprep.subr.mxu0 0.0
    %295 = vmatpush1.msra.mxu0 %v135
    %296 = vmatprep.subr.mxu0 0.0
    %297 = vmatpush1.msra.mxu0 %v136
    %298 = vmatprep.subr.mxu0 0.0
    %299 = vmatpush1.msra.mxu0 %v137
    %300 = vmatprep.subr.mxu0 0.0
    %301 = vmatpush1.msra.mxu0 %v138
    %302 = vmatprep.subr.mxu0 0.0
    %303 = vmatpush1.msra.mxu0 %v139
    %304 = vmatprep.subr.mxu0 0.0
    %305 = vmatpush1.msra.mxu0 %v140
    %306 = vmatprep.subr.mxu0 0.0
    %307 = vmatpush1.msra.mxu0 %v141
    %308 = vmatprep.subr.mxu0 0.0
    %309 = vmatpush1.msra.mxu0 %v142
    %310 = vmatprep.subr.mxu0 0.0
    %311 = vmatpush1.msra.mxu0 %v143
    %312 = vmatprep.subr.mxu0 0.0
    %313 = vmatpush1.msra.mxu0 %v144
    %314 = vmatprep.subr.mxu0 0.0
    %315 = vmatpush1.msra.mxu0 %v145
    %316 = vmatprep.subr.mxu0 0.0
    %317 = vmatpush1.msra.mxu0 %v146
    %318 = vmatprep.subr.mxu0 0.0
    %319 = vmatpush1.msra.mxu0 %v147
    %320 = vmatprep.mubr.f32.mxu0 %v80
    %321 = vmatmul.mubr.f32.gmra.mrb[0].mxu0 %v79
    %v322 = vpop.f32.mrb[0].mxu0
    %v323 = vadd.f32 %v253, %v322
    %v324 = vpop.f32.mrb[0].mxu0
    %325 = vdwg.mxu0
    %326 = vmatprep.subr.mxu0 0.0
    %327 = vmatpush1.msra.mxu0 %v148
    %328 = vmatprep.subr.mxu0 0.0
    %329 = vmatpush1.msra.mxu0 %v149
    %330 = vmatprep.subr.mxu0 0.0
    %331 = vmatpush1.msra.mxu0 %v150
    %332 = vmatprep.subr.mxu0 0.0
    %333 = vmatpush1.msra.mxu0 %v151
    %334 = vmatprep.subr.mxu0 0.0
    %335 = vmatpush1.msra.mxu0 %v152
    %336 = vmatprep.subr.mxu0 0.0
    %337 = vmatpush1.msra.mxu0 %v153
    %338 = vmatprep.subr.mxu0 0.0
    %339 = vmatpush1.msra.mxu0 %v154
    %340 = vmatprep.subr.mxu0 0.0
    %341 = vmatpush1.msra.mxu0 %v155
    %342 = vmatprep.subr.mxu0 0.0
    %343 = vmatpush1.msra.mxu0 %v156
    %344 = vmatprep.subr.mxu0 0.0
    %345 = vmatpush1.msra.mxu0 %v157
    %346 = vmatprep.subr.mxu0 0.0
    %347 = vmatpush1.msra.mxu0 %v158
    %348 = vmatprep.subr.mxu0 0.0
    %349 = vmatpush1.msra.mxu0 %v159
    %350 = vmatprep.subr.mxu0 0.0
    %351 = vmatpush1.msra.mxu0 %v160
    %352 = vmatprep.subr.mxu0 0.0
    %353 = vmatpush1.msra.mxu0 %v161
    %354 = vmatprep.subr.mxu0 0.0
    %355 = vmatpush1.msra.mxu0 %v162
    %356 = vmatprep.subr.mxu0 0.0
    %357 = vmatpush1.msra.mxu0 %v163
    %358 = vmatprep.subr.mxu0 0.0
    %359 = vmatpush1.msra.mxu0 %v164
    %360 = vmatprep.subr.mxu0 0.0
    %361 = vmatpush1.msra.mxu0 %v165
    %362 = vmatprep.subr.mxu0 0.0
    %363 = vmatpush1.msra.mxu0 %v166
    %364 = vmatprep.subr.mxu0 0.0
    %365 = vmatpush1.msra.mxu0 %v167
    %366 = vmatprep.subr.mxu0 0.0
    %367 = vmatpush1.msra.mxu0 %v168
    %368 = vmatprep.subr.mxu0 0.0
    %369 = vmatpush1.msra.mxu0 %v169
    %370 = vmatprep.subr.mxu0 0.0
    %371 = vmatpush1.msra.mxu0 %v170
    %372 = vmatprep.subr.mxu0 0.0
    %373 = vmatpush1.msra.mxu0 %v171
    %374 = vmatprep.subr.mxu0 0.0
    %375 = vmatpush1.msra.mxu0 %v172
    %376 = vmatprep.subr.mxu0 0.0
    %377 = vmatpush1.msra.mxu0 %v173
    %378 = vmatprep.subr.mxu0 0.0
    %379 = vmatpush1.msra.mxu0 %v174
    %380 = vmatprep.subr.mxu0 0.0
    %381 = vmatpush1.msra.mxu0 %v175
    %382 = vmatprep.subr.mxu0 0.0
    %383 = vmatpush1.msra.mxu0 %v176
    %384 = vmatprep.subr.mxu0 0.0
    %385 = vmatpush1.msra.mxu0 %v177
    %386 = vmatprep.subr.mxu0 0.0
    %387 = vmatpush1.msra.mxu0 %v178
    %388 = vmatprep.subr.mxu0 0.0
    %389 = vmatpush1.msra.mxu0 %v179
    %390 = vmatprep.mubr.f32.mxu0 %v82
    %391 = vmatmul.mubr.f32.gmra.mrb[0].mxu0 %v81
    %v392 = vpop.f32.mrb[0].mxu0
    %v393 = vadd.f32 %v323, %v392
    %v394 = vpop.f32.mrb[0].mxu0
    %395 = vdwg.mxu0
    %396 = vmatprep.subr.mxu0 0.0
    %397 = vmatpush1.msra.mxu0 %v180
    %398 = vmatprep.subr.mxu0 0.0
    %399 = vmatpush1.msra.mxu0 %v181
    %400 = vmatprep.subr.mxu0 0.0
    %401 = vmatpush1.msra.mxu0 0.0
    %402 = vmatprep.subr.mxu0 0.0
    %403 = vmatpush1.msra.mxu0 0.0
    %404 = vmatprep.subr.mxu0 0.0
    %405 = vmatpush1.msra.mxu0 0.0
    %406 = vmatprep.subr.mxu0 0.0
    %407 = vmatpush1.msra.mxu0 0.0
    %408 = vmatprep.subr.mxu0 0.0
    %409 = vmatpush1.msra.mxu0 0.0
    %410 = vmatprep.subr.mxu0 0.0
    %411 = vmatpush1.msra.mxu0 0.0
    %412 = vmatprep.subr.mxu0 0.0
    %413 = vmatpush1.msra.mxu0 0.0
    %414 = vmatprep.subr.mxu0 0.0
    %415 = vmatpush1.msra.mxu0 0.0
    %416 = vmatprep.subr.mxu0 0.0
    %417 = vmatpush1.msra.mxu0 0.0
    %418 = vmatprep.subr.mxu0 0.0
    %419 = vmatpush1.msra.mxu0 0.0
    %420 = vmatprep.subr.mxu0 0.0
    %421 = vmatpush1.msra.mxu0 0.0
    %422 = vmatprep.subr.mxu0 0.0
    %423 = vmatpush1.msra.mxu0 0.0
    %424 = vmatprep.subr.mxu0 0.0
    %425 = vmatpush1.msra.mxu0 0.0
    %426 = vmatprep.subr.mxu0 0.0
    %427 = vmatpush1.msra.mxu0 0.0
    %428 = vmatprep.subr.mxu0 0.0
    %429 = vmatpush1.msra.mxu0 0.0
    %430 = vmatprep.subr.mxu0 0.0
    %431 = vmatpush1.msra.mxu0 0.0
    %432 = vmatprep.subr.mxu0 0.0
    %433 = vmatpush1.msra.mxu0 0.0
    %434 = vmatprep.subr.mxu0 0.0
    %435 = vmatpush1.msra.mxu0 0.0
    %436 = vmatprep.subr.mxu0 0.0
    %437 = vmatpush1.msra.mxu0 0.0
    %438 = vmatprep.subr.mxu0 0.0
    %439 = vmatpush1.msra.mxu0 0.0
    %440 = vmatprep.subr.mxu0 0.0
    %441 = vmatpush1.msra.mxu0 0.0
    %442 = vmatprep.subr.mxu0 0.0
    %443 = vmatpush1.msra.mxu0 0.0
    %444 = vmatprep.subr.mxu0 0.0
    %445 = vmatpush1.msra.mxu0 0.0
    %446 = vmatprep.subr.mxu0 0.0
    %447 = vmatpush1.msra.mxu0 0.0
    %448 = vmatprep.subr.mxu0 0.0
    %449 = vmatpush1.msra.mxu0 0.0
    %450 = vmatprep.subr.mxu0 0.0
    %451 = vmatpush1.msra.mxu0 0.0
    %452 = vmatprep.subr.mxu0 0.0
    %453 = vmatpush1.msra.mxu0 0.0
    %454 = vmatprep.subr.mxu0 0.0
    %455 = vmatpush1.msra.mxu0 0.0
    %456 = vmatprep.subr.mxu0 0.0
    %457 = vmatpush1.msra.mxu0 0.0
    %458 = vmatprep.subr.mxu0 0.0
    %459 = vmatpush1.msra.mxu0 0.0
    %460 = vmatprep.mubr.f32.mxu0 0.0
    %461 = vmatmul.mubr.f32.gmra.mrb[0].mxu0 %v184
    %v462 = vpop.f32.mrb[0].mxu0
    %v463 = vadd.f32 %v393, %v462
    %v464 = vpop.f32.mrb[0].mxu0
    %465 = vdwg.mxu0
    %466 = vst [vmem:[%s8] sm:$0xff] %v463
    %v467 = vld [vmem:[#allocation4] sm:$0xff]
    %v468 = vld [vmem:[#allocation4 + $0x8] sm:$0xff]
    %v469 = vld [vmem:[#allocation4 + $0x10] sm:$0xff]
    %v470 = vld [vmem:[#allocation4 + $0x18] sm:$0xff]
    %v471 = vld [vmem:[#allocation4 + $0x20] sm:$0xff]
    %v472 = vld [vmem:[#allocation4 + $0x28] sm:$0xff]
    %v473 = vld [vmem:[#allocation4 + $0x30] sm:$0xff]
    %v474 = vld [vmem:[#allocation4 + $0x38] sm:$0xff]
    %v475 = vld [vmem:[#allocation4 + $0x40] sm:$0xff]
    %v476 = vld [vmem:[#allocation4 + $0x48] sm:$0xff]
    %v477 = vld [vmem:[#allocation4 + $0x50] sm:$0xff]
    %v478 = vld [vmem:[#allocation4 + $0x58] sm:$0xff]
    %v479 = vld [vmem:[#allocation4 + $0x60] sm:$0xff]
    %v480 = vld [vmem:[#allocation4 + $0x68] sm:$0xff]
    %v481 = vld [vmem:[#allocation4 + $0x70] sm:$0xff]
    %v482 = vld [vmem:[#allocation4 + $0x78] sm:$0xff]
    %v483 = vld [vmem:[#allocation4 + $0x80] sm:$0xff]
    %v484 = vld [vmem:[#allocation4 + $0x88] sm:$0xff]
    %v485 = vld [vmem:[#allocation4 + $0x90] sm:$0xff]
    %v486 = vld [vmem:[#allocation4 + $0x98] sm:$0xff]
    %v487 = vld [vmem:[#allocation4 + $0xa0] sm:$0xff]
    %v488 = vld [vmem:[#allocation4 + $0xa8] sm:$0xff]
    %v489 = vld [vmem:[#allocation4 + $0xb0] sm:$0xff]
    %v490 = vld [vmem:[#allocation4 + $0xb8] sm:$0xff]
    %v491 = vld [vmem:[#allocation4 + $0xc0] sm:$0xff]
    %v492 = vld [vmem:[#allocation4 + $0xc8] sm:$0xff]
    %v493 = vld [vmem:[#allocation4 + $0xd0] sm:$0xff]
    %v494 = vld [vmem:[#allocation4 + $0xd8] sm:$0xff]
    %v495 = vld [vmem:[#allocation4 + $0xe0] sm:$0xff]
    %v496 = vld [vmem:[#allocation4 + $0xe8] sm:$0xff]
    %v497 = vld [vmem:[#allocation4 + $0xf0] sm:$0xff]
    %v498 = vld [vmem:[#allocation4 + $0xf8] sm:$0xff]
    %v499 = vld [vmem:[#allocation4 + $0x100] sm:$0xff]
    %v500 = vld [vmem:[#allocation4 + $0x108] sm:$0xff]
    %v501 = vld [vmem:[#allocation4 + $0x110] sm:$0xff]
    %v502 = vld [vmem:[#allocation4 + $0x118] sm:$0xff]
    %v503 = vld [vmem:[#allocation4 + $0x120] sm:$0xff]
    %v504 = vld [vmem:[#allocation4 + $0x128] sm:$0xff]
    %v505 = vld [vmem:[#allocation4 + $0x130] sm:$0xff]
    %v506 = vld [vmem:[#allocation4 + $0x138] sm:$0xff]
    %v507 = vld [vmem:[#allocation4 + $0x140] sm:$0xff]
    %v508 = vld [vmem:[#allocation4 + $0x148] sm:$0xff]
    %v509 = vld [vmem:[#allocation4 + $0x150] sm:$0xff]
    %v510 = vld [vmem:[#allocation4 + $0x158] sm:$0xff]
    %v511 = vld [vmem:[#allocation4 + $0x160] sm:$0xff]
    %v512 = vld [vmem:[#allocation4 + $0x168] sm:$0xff]
    %v513 = vld [vmem:[#allocation4 + $0x170] sm:$0xff]
    %v514 = vld [vmem:[#allocation4 + $0x178] sm:$0xff]
    %v515 = vld [vmem:[#allocation4 + $0x180] sm:$0xff]
    %v516 = vld [vmem:[#allocation4 + $0x188] sm:$0xff]
    %v517 = vld [vmem:[#allocation4 + $0x190] sm:$0xff]
    %v518 = vld [vmem:[#allocation4 + $0x198] sm:$0xff]
    %v519 = vld [vmem:[#allocation4 + $0x1a0] sm:$0xff]
    %v520 = vld [vmem:[#allocation4 + $0x1a8] sm:$0xff]
    %v521 = vld [vmem:[#allocation4 + $0x1b0] sm:$0xff]
    %v522 = vld [vmem:[#allocation4 + $0x1b8] sm:$0xff]
    %v523 = vld [vmem:[#allocation4 + $0x1c0] sm:$0xff]
    %v524 = vld [vmem:[#allocation4 + $0x1c8] sm:$0xff]
    %v525 = vld [vmem:[#allocation4 + $0x1d0] sm:$0xff]
    %v526 = vld [vmem:[#allocation4 + $0x1d8] sm:$0xff]
    %v527 = vld [vmem:[#allocation4 + $0x1e0] sm:$0xff]
    %v528 = vld [vmem:[#allocation4 + $0x1e8] sm:$0xff]
    %v529 = vld [vmem:[#allocation4 + $0x1f0] sm:$0xff]
    %v530 = vld [vmem:[#allocation4 + $0x1f8] sm:$0xff]
    %v531 = vld [vmem:[#allocation4 + $0x200] sm:$0xff]
    %v532 = vld [vmem:[#allocation4 + $0x208] sm:$0xff]
    %v533 = vld [vmem:[#allocation4 + $0x210] sm:$0xff]
    %v534 = vld [vmem:[#allocation4 + $0x218] sm:$0xff]
    %v535 = vld [vmem:[#allocation4 + $0x220] sm:$0xff]
    %v536 = vld [vmem:[#allocation4 + $0x228] sm:$0xff]
    %v537 = vld [vmem:[#allocation4 + $0x230] sm:$0xff]
    %v538 = vld [vmem:[#allocation4 + $0x238] sm:$0xff]
    %v539 = vld [vmem:[#allocation4 + $0x240] sm:$0xff]
    %v540 = vld [vmem:[#allocation4 + $0x248] sm:$0xff]
    %v541 = vld [vmem:[#allocation4 + $0x250] sm:$0xff]
    %v542 = vld [vmem:[#allocation4 + $0x258] sm:$0xff]
    %v543 = vld [vmem:[#allocation4 + $0x260] sm:$0xff]
    %v544 = vld [vmem:[#allocation4 + $0x268] sm:$0xff]
    %v545 = vld [vmem:[#allocation4 + $0x270] sm:$0xff]
    %v546 = vld [vmem:[#allocation4 + $0x278] sm:$0xff]
    %v547 = vld [vmem:[#allocation4 + $0x280] sm:$0xff]
    %v548 = vld [vmem:[#allocation4 + $0x288] sm:$0xff]
    %v549 = vld [vmem:[#allocation4 + $0x290] sm:$0xff]
    %v550 = vld [vmem:[#allocation4 + $0x298] sm:$0xff]
    %v551 = vld [vmem:[#allocation4 + $0x2a0] sm:$0xff]
    %v552 = vld [vmem:[#allocation4 + $0x2a8] sm:$0xff]
    %v553 = vld [vmem:[#allocation4 + $0x2b0] sm:$0xff]
    %v554 = vld [vmem:[#allocation4 + $0x2b8] sm:$0xff]
    %v555 = vld [vmem:[#allocation4 + $0x2c0] sm:$0xff]
    %v556 = vld [vmem:[#allocation4 + $0x2c8] sm:$0xff]
    %v557 = vld [vmem:[#allocation4 + $0x2d0] sm:$0xff]
    %v558 = vld [vmem:[#allocation4 + $0x2d8] sm:$0xff]
    %v559 = vld [vmem:[#allocation4 + $0x2e0] sm:$0xff]
    %v560 = vld [vmem:[#allocation4 + $0x2e8] sm:$0xff]
    %v561 = vld [vmem:[#allocation4 + $0x2f0] sm:$0xff]
    %v562 = vld [vmem:[#allocation4 + $0x2f8] sm:$0xff]
    %v563 = vld [vmem:[#allocation4 + $0x300] sm:$0xff]
    %v564 = vld [vmem:[#allocation4 + $0x308] sm:$0xff]
    %v565 = vld [vmem:[#allocation4 + $0x310] sm:$0xff]
    %v566 = vld [vmem:[#allocation4 + $0x318] sm:$0xff]
    %v567 = vld [vmem:[#allocation4 + $0x320] sm:$0xff]
    %v568 = vld [vmem:[#allocation4 + $0x328] sm:$0xff]
    %v569 = vld [vmem:[#allocation4 + $0x330] sm:$0xff]
    %v570 = vld [vmem:[#allocation4 + $0x338] sm:$0xff]
    %v571 = vld [vmem:[#allocation4 + $0x340] sm:$0xff]
    %v572 = vld [vmem:[#allocation4 + $0x348] sm:$0xff]
    %v573 = vld [vmem:[#allocation4 + $0x350] sm:$0xff]
    %v574 = vld [vmem:[#allocation4 + $0x358] sm:$0xff]
    %v575 = vld [vmem:[#allocation4 + $0x360] sm:$0xff]
    %v576 = vld [vmem:[#allocation4 + $0x368] sm:$0xff]
    %v577 = vld [vmem:[#allocation4 + $0x370] sm:$0xff]
    %v578 = vld [vmem:[#allocation4 + $0x378] sm:$0xff]
    %v579 = vld [vmem:[#allocation4 + $0x380] sm:$0xff]
    %v580 = vld [vmem:[#allocation4 + $0x388] sm:$0xff]
    %v581 = vld [vmem:[#allocation4 + $0x390] sm:$0xff]
    %v582 = vld [vmem:[#allocation4 + $0x398] sm:$0xff]
    %v583 = vld [vmem:[#allocation4 + $0x3a0] sm:$0xff]
    %v584 = vld [vmem:[#allocation4 + $0x3a8] sm:$0xff]
    %v585 = vld [vmem:[#allocation4 + $0x3b0] sm:$0xff]
    %v586 = vld [vmem:[#allocation4 + $0x3b8] sm:$0xff]
    %v587 = vld [vmem:[#allocation4 + $0x3c0] sm:$0xff]
    %v588 = vld [vmem:[#allocation4 + $0x3c8] sm:$0xff]
    %v589 = vld [vmem:[#allocation4 + $0x3d0] sm:$0xff]
    %v590 = vld [vmem:[#allocation4 + $0x3d8] sm:$0xff]
    %v591 = vld [vmem:[#allocation4 + $0x3e0] sm:$0xff]
    %v592 = vld [vmem:[#allocation4 + $0x3e8] sm:$0xff]
    %v593 = vld [vmem:[#allocation4 + $0x3f0] sm:$0xff]
    %v594 = vld [vmem:[#allocation4 + $0x3f8] sm:$0xff]
    %v595 = vld [vmem:[#allocation6] sm:$0xff]
    %v597 = vlaneseq
    %v598 = vshrl.u32 %v597, 7
    %v599 = vsub.s32 0, %v598
    %v600 = vrot.slane %v595, %v599
    %v601 = vlaneseq
    %v602 = vshrl.u32 %v601, 7
    %v603 = vsub.s32 1, %v602
    %v604 = vrot.slane %v595, %v603
    %v605 = vlaneseq
    %v606 = vshrl.u32 %v605, 7
    %v607 = vsub.s32 2, %v606
    %v608 = vrot.slane %v595, %v607
    %v609 = vlaneseq
    %v610 = vshrl.u32 %v609, 7
    %v611 = vsub.s32 3, %v610
    %v612 = vrot.slane %v595, %v611
    %v613 = vlaneseq
    %v614 = vshrl.u32 %v613, 7
    %v615 = vsub.s32 4, %v614
    %v616 = vrot.slane %v595, %v615
    %v617 = vlaneseq
    %v618 = vshrl.u32 %v617, 7
    %v619 = vsub.s32 5, %v618
    %v620 = vrot.slane %v595, %v619
    %v621 = vlaneseq
    %v622 = vshrl.u32 %v621, 7
    %v623 = vsub.s32 6, %v622
    %v624 = vrot.slane %v595, %v623
    %v625 = vlaneseq
    %v626 = vshrl.u32 %v625, 7
    %v627 = vsub.s32 7, %v626
    %v628 = vrot.slane %v595, %v627
    %637 = vmatprep.subr.mxu0 %v468
    %638 = vmatpush1.msra.mxu0 %v467
    %639 = vmatprep.subr.mxu0 %v476
    %640 = vmatpush1.msra.mxu0 %v475
    %641 = vmatprep.subr.mxu0 %v484
    %642 = vmatpush1.msra.mxu0 %v483
    %643 = vmatprep.subr.mxu0 %v492
    %644 = vmatpush1.msra.mxu0 %v491
    %645 = vmatprep.subr.mxu0 %v500
    %646 = vmatpush1.msra.mxu0 %v499
    %647 = vmatprep.subr.mxu0 %v508
    %648 = vmatpush1.msra.mxu0 %v507
    %649 = vmatprep.subr.mxu0 %v516
    %650 = vmatpush1.msra.mxu0 %v515
    %651 = vmatprep.subr.mxu0 %v524
    %652 = vmatpush1.msra.mxu0 %v523
    %653 = vmatprep.subr.mxu0 %v532
    %654 = vmatpush1.msra.mxu0 %v531
    %655 = vmatprep.subr.mxu0 %v540
    %656 = vmatpush1.msra.mxu0 %v539
    %657 = vmatprep.subr.mxu0 %v548
    %658 = vmatpush1.msra.mxu0 %v547
    %659 = vmatprep.subr.mxu0 %v556
    %660 = vmatpush1.msra.mxu0 %v555
    %661 = vmatprep.subr.mxu0 %v564
    %662 = vmatpush1.msra.mxu0 %v563
    %663 = vmatprep.subr.mxu0 %v572
    %664 = vmatpush1.msra.mxu0 %v571
    %665 = vmatprep.subr.mxu0 %v580
    %666 = vmatpush1.msra.mxu0 %v579
    %667 = vmatprep.subr.mxu0 %v588
    %668 = vmatpush1.msra.mxu0 %v587
    %669 = vmatprep.subr.mxu0 0.0
    %670 = vmatpush1.msra.mxu0 0.0
    %671 = vmatprep.subr.mxu0 0.0
    %672 = vmatpush1.msra.mxu0 0.0
    %673 = vmatprep.subr.mxu0 0.0
    %674 = vmatpush1.msra.mxu0 0.0
    %675 = vmatprep.subr.mxu0 0.0
    %676 = vmatpush1.msra.mxu0 0.0
    %677 = vmatprep.subr.mxu0 0.0
    %678 = vmatpush1.msra.mxu0 0.0
    %679 = vmatprep.subr.mxu0 0.0
    %680 = vmatpush1.msra.mxu0 0.0
    %681 = vmatprep.subr.mxu0 0.0
    %682 = vmatpush1.msra.mxu0 0.0
    %683 = vmatprep.subr.mxu0 0.0
    %684 = vmatpush1.msra.mxu0 0.0
    %685 = vmatprep.subr.mxu0 0.0
    %686 = vmatpush1.msra.mxu0 0.0
    %687 = vmatprep.subr.mxu0 0.0
    %688 = vmatpush1.msra.mxu0 0.0
    %689 = vmatprep.subr.mxu0 0.0
    %690 = vmatpush1.msra.mxu0 0.0
    %691 = vmatprep.subr.mxu0 0.0
    %692 = vmatpush1.msra.mxu0 0.0
    %693 = vmatprep.subr.mxu0 0.0
    %694 = vmatpush1.msra.mxu0 0.0
    %695 = vmatprep.subr.mxu0 0.0
    %696 = vmatpush1.msra.mxu0 0.0
    %697 = vmatprep.subr.mxu0 0.0
    %698 = vmatpush1.msra.mxu0 0.0
    %699 = vmatprep.subr.mxu0 0.0
    %700 = vmatpush1.msra.mxu0 0.0
    %701 = vmatprep.mubr.f32.mxu0 0.0
    %702 = vmatmul.mubr.f32.gmra.mrb[0].mxu0 %v463
    %v703 = vpop.f32.mrb[0].mxu0
    %v704 = vadd.f32 %v600, %v703
    %v705 = vpop.f32.mrb[0].mxu0
    %v706 = vadd.f32 %v604, %v705
    %707 = vdwg.mxu0
    %708 = vmatprep.subr.mxu0 %v470
    %709 = vmatpush1.msra.mxu0 %v469
    %710 = vmatprep.subr.mxu0 %v478
    %711 = vmatpush1.msra.mxu0 %v477
    %712 = vmatprep.subr.mxu0 %v486
    %713 = vmatpush1.msra.mxu0 %v485
    %714 = vmatprep.subr.mxu0 %v494
    %715 = vmatpush1.msra.mxu0 %v493
    %716 = vmatprep.subr.mxu0 %v502
    %717 = vmatpush1.msra.mxu0 %v501
    %718 = vmatprep.subr.mxu0 %v510
    %719 = vmatpush1.msra.mxu0 %v509
    %720 = vmatprep.subr.mxu0 %v518
    %721 = vmatpush1.msra.mxu0 %v517
    %722 = vmatprep.subr.mxu0 %v526
    %723 = vmatpush1.msra.mxu0 %v525
    %724 = vmatprep.subr.mxu0 %v534
    %725 = vmatpush1.msra.mxu0 %v533
    %726 = vmatprep.subr.mxu0 %v542
    %727 = vmatpush1.msra.mxu0 %v541
    %728 = vmatprep.subr.mxu0 %v550
    %729 = vmatpush1.msra.mxu0 %v549
    %730 = vmatprep.subr.mxu0 %v558
    %731 = vmatpush1.msra.mxu0 %v557
    %732 = vmatprep.subr.mxu0 %v566
    %733 = vmatpush1.msra.mxu0 %v565
    %734 = vmatprep.subr.mxu0 %v574
    %735 = vmatpush1.msra.mxu0 %v573
    %736 = vmatprep.subr.mxu0 %v582
    %737 = vmatpush1.msra.mxu0 %v581
    %738 = vmatprep.subr.mxu0 %v590
    %739 = vmatpush1.msra.mxu0 %v589
    %740 = vmatprep.subr.mxu0 0.0
    %741 = vmatpush1.msra.mxu0 0.0
    %742 = vmatprep.subr.mxu0 0.0
    %743 = vmatpush1.msra.mxu0 0.0
    %744 = vmatprep.subr.mxu0 0.0
    %745 = vmatpush1.msra.mxu0 0.0
    %746 = vmatprep.subr.mxu0 0.0
    %747 = vmatpush1.msra.mxu0 0.0
    %748 = vmatprep.subr.mxu0 0.0
    %749 = vmatpush1.msra.mxu0 0.0
    %750 = vmatprep.subr.mxu0 0.0
    %751 = vmatpush1.msra.mxu0 0.0
    %752 = vmatprep.subr.mxu0 0.0
    %753 = vmatpush1.msra.mxu0 0.0
    %754 = vmatprep.subr.mxu0 0.0
    %755 = vmatpush1.msra.mxu0 0.0
    %756 = vmatprep.subr.mxu0 0.0
    %757 = vmatpush1.msra.mxu0 0.0
    %758 = vmatprep.subr.mxu0 0.0
    %759 = vmatpush1.msra.mxu0 0.0
    %760 = vmatprep.subr.mxu0 0.0
    %761 = vmatpush1.msra.mxu0 0.0
    %762 = vmatprep.subr.mxu0 0.0
    %763 = vmatpush1.msra.mxu0 0.0
    %764 = vmatprep.subr.mxu0 0.0
    %765 = vmatpush1.msra.mxu0 0.0
    %766 = vmatprep.subr.mxu0 0.0
    %767 = vmatpush1.msra.mxu0 0.0
    %768 = vmatprep.subr.mxu0 0.0
    %769 = vmatpush1.msra.mxu0 0.0
    %770 = vmatprep.subr.mxu0 0.0
    %771 = vmatpush1.msra.mxu0 0.0
    %772 = vmatprep.mubr.f32.mxu0 0.0
    %773 = vmatmul.mubr.f32.gmra.mrb[0].mxu0 %v463
    %v774 = vpop.f32.mrb[0].mxu0
    %v775 = vadd.f32 %v608, %v774
    %v776 = vpop.f32.mrb[0].mxu0
    %v777 = vadd.f32 %v612, %v776
    %778 = vdwg.mxu0
    %779 = vmatprep.subr.mxu0 %v472
    %780 = vmatpush1.msra.mxu0 %v471
    %781 = vmatprep.subr.mxu0 %v480
    %782 = vmatpush1.msra.mxu0 %v479
    %783 = vmatprep.subr.mxu0 %v488
    %784 = vmatpush1.msra.mxu0 %v487
    %785 = vmatprep.subr.mxu0 %v496
    %786 = vmatpush1.msra.mxu0 %v495
    %787 = vmatprep.subr.mxu0 %v504
    %788 = vmatpush1.msra.mxu0 %v503
    %789 = vmatprep.subr.mxu0 %v512
    %790 = vmatpush1.msra.mxu0 %v511
    %791 = vmatprep.subr.mxu0 %v520
    %792 = vmatpush1.msra.mxu0 %v519
    %793 = vmatprep.subr.mxu0 %v528
    %794 = vmatpush1.msra.mxu0 %v527
    %795 = vmatprep.subr.mxu0 %v536
    %796 = vmatpush1.msra.mxu0 %v535
    %797 = vmatprep.subr.mxu0 %v544
    %798 = vmatpush1.msra.mxu0 %v543
    %799 = vmatprep.subr.mxu0 %v552
    %800 = vmatpush1.msra.mxu0 %v551
    %801 = vmatprep.subr.mxu0 %v560
    %802 = vmatpush1.msra.mxu0 %v559
    %803 = vmatprep.subr.mxu0 %v568
    %804 = vmatpush1.msra.mxu0 %v567
    %805 = vmatprep.subr.mxu0 %v576
    %806 = vmatpush1.msra.mxu0 %v575
    %807 = vmatprep.subr.mxu0 %v584
    %808 = vmatpush1.msra.mxu0 %v583
    %809 = vmatprep.subr.mxu0 %v592
    %810 = vmatpush1.msra.mxu0 %v591
    %811 = vmatprep.subr.mxu0 0.0
    %812 = vmatpush1.msra.mxu0 0.0
    %813 = vmatprep.subr.mxu0 0.0
    %814 = vmatpush1.msra.mxu0 0.0
    %815 = vmatprep.subr.mxu0 0.0
    %816 = vmatpush1.msra.mxu0 0.0
    %817 = vmatprep.subr.mxu0 0.0
    %818 = vmatpush1.msra.mxu0 0.0
    %819 = vmatprep.subr.mxu0 0.0
    %820 = vmatpush1.msra.mxu0 0.0
    %821 = vmatprep.subr.mxu0 0.0
    %822 = vmatpush1.msra.mxu0 0.0
    %823 = vmatprep.subr.mxu0 0.0
    %824 = vmatpush1.msra.mxu0 0.0
    %825 = vmatprep.subr.mxu0 0.0
    %826 = vmatpush1.msra.mxu0 0.0
    %827 = vmatprep.subr.mxu0 0.0
    %828 = vmatpush1.msra.mxu0 0.0
    %829 = vmatprep.subr.mxu0 0.0
    %830 = vmatpush1.msra.mxu0 0.0
    %831 = vmatprep.subr.mxu0 0.0
    %832 = vmatpush1.msra.mxu0 0.0
    %833 = vmatprep.subr.mxu0 0.0
    %834 = vmatpush1.msra.mxu0 0.0
    %835 = vmatprep.subr.mxu0 0.0
    %836 = vmatpush1.msra.mxu0 0.0
    %837 = vmatprep.subr.mxu0 0.0
    %838 = vmatpush1.msra.mxu0 0.0
    %839 = vmatprep.subr.mxu0 0.0
    %840 = vmatpush1.msra.mxu0 0.0
    %841 = vmatprep.subr.mxu0 0.0
    %842 = vmatpush1.msra.mxu0 0.0
    %843 = vmatprep.mubr.f32.mxu0 0.0
    %844 = vmatmul.mubr.f32.gmra.mrb[0].mxu0 %v463
    %v845 = vpop.f32.mrb[0].mxu0
    %v846 = vadd.f32 %v616, %v845
    %v847 = vpop.f32.mrb[0].mxu0
    %v848 = vadd.f32 %v620, %v847
    %849 = vdwg.mxu0
    %850 = vmatprep.subr.mxu0 %v474
    %851 = vmatpush1.msra.mxu0 %v473
    %852 = vmatprep.subr.mxu0 %v482
    %853 = vmatpush1.msra.mxu0 %v481
    %854 = vmatprep.subr.mxu0 %v490
    %855 = vmatpush1.msra.mxu0 %v489
    %856 = vmatprep.subr.mxu0 %v498
    %857 = vmatpush1.msra.mxu0 %v497
    %858 = vmatprep.subr.mxu0 %v506
    %859 = vmatpush1.msra.mxu0 %v505
    %860 = vmatprep.subr.mxu0 %v514
    %861 = vmatpush1.msra.mxu0 %v513
    %862 = vmatprep.subr.mxu0 %v522
    %863 = vmatpush1.msra.mxu0 %v521
    %864 = vmatprep.subr.mxu0 %v530
    %865 = vmatpush1.msra.mxu0 %v529
    %866 = vmatprep.subr.mxu0 %v538
    %867 = vmatpush1.msra.mxu0 %v537
    %868 = vmatprep.subr.mxu0 %v546
    %869 = vmatpush1.msra.mxu0 %v545
    %870 = vmatprep.subr.mxu0 %v554
    %871 = vmatpush1.msra.mxu0 %v553
    %872 = vmatprep.subr.mxu0 %v562
    %873 = vmatpush1.msra.mxu0 %v561
    %874 = vmatprep.subr.mxu0 %v570
    %875 = vmatpush1.msra.mxu0 %v569
    %876 = vmatprep.subr.mxu0 %v578
    %877 = vmatpush1.msra.mxu0 %v577
    %878 = vmatprep.subr.mxu0 %v586
    %879 = vmatpush1.msra.mxu0 %v585
    %880 = vmatprep.subr.mxu0 %v594
    %881 = vmatpush1.msra.mxu0 %v593
    %882 = vmatprep.subr.mxu0 0.0
    %883 = vmatpush1.msra.mxu0 0.0
    %884 = vmatprep.subr.mxu0 0.0
    %885 = vmatpush1.msra.mxu0 0.0
    %886 = vmatprep.subr.mxu0 0.0
    %887 = vmatpush1.msra.mxu0 0.0
    %888 = vmatprep.subr.mxu0 0.0
    %889 = vmatpush1.msra.mxu0 0.0
    %890 = vmatprep.subr.mxu0 0.0
    %891 = vmatpush1.msra.mxu0 0.0
    %892 = vmatprep.subr.mxu0 0.0
    %893 = vmatpush1.msra.mxu0 0.0
    %894 = vmatprep.subr.mxu0 0.0
    %895 = vmatpush1.msra.mxu0 0.0
    %896 = vmatprep.subr.mxu0 0.0
    %897 = vmatpush1.msra.mxu0 0.0
    %898 = vmatprep.subr.mxu0 0.0
    %899 = vmatpush1.msra.mxu0 0.0
    %900 = vmatprep.subr.mxu0 0.0
    %901 = vmatpush1.msra.mxu0 0.0
    %902 = vmatprep.subr.mxu0 0.0
    %903 = vmatpush1.msra.mxu0 0.0
    %904 = vmatprep.subr.mxu0 0.0
    %905 = vmatpush1.msra.mxu0 0.0
    %906 = vmatprep.subr.mxu0 0.0
    %907 = vmatpush1.msra.mxu0 0.0
    %908 = vmatprep.subr.mxu0 0.0
    %909 = vmatpush1.msra.mxu0 0.0
    %910 = vmatprep.subr.mxu0 0.0
    %911 = vmatpush1.msra.mxu0 0.0
    %912 = vmatprep.subr.mxu0 0.0
    %913 = vmatpush1.msra.mxu0 0.0
    %914 = vmatprep.mubr.f32.mxu0 0.0
    %915 = vmatmul.mubr.f32.gmra.mrb[0].mxu0 %v463
    %v916 = vpop.f32.mrb[0].mxu0
    %v917 = vadd.f32 %v624, %v916
    %v918 = vpop.f32.mrb[0].mxu0
    %v919 = vadd.f32 %v628, %v918
    %920 = vdwg.mxu0
    %v921 = vmax.f32 %v704, 0.0
    %v922 = vmax.f32 %v706, 0.0
    %v923 = vmax.f32 %v775, 0.0
    %v924 = vmax.f32 %v777, 0.0
    %v925 = vmax.f32 %v846, 0.0
    %v926 = vmax.f32 %v848, 0.0
    %v927 = vmax.f32 %v917, 0.0
    %v928 = vmax.f32 %v919, 0.0
    %v929 = vmax.f32 %v921, %v923
    %v930 = vmax.f32 %v922, %v924
    %v931 = vmax.f32 %v925, %v927
    %v932 = vmax.f32 %v926, %v928
    %v933 = vmax.f32 %v929, %v931
    %v934 = vmax.f32 %v930, %v932
    %v935 = vld [vmem:[%s4] sm:$0xff]
    %v936 = vld [vmem:[%s4 + $0x8] sm:$0xff]
    %v937 = vld [vmem:[%s4 + $0x10] sm:$0xff]
    %v938 = vld [vmem:[%s4 + $0x18] sm:$0xff]
    %v939 = vld [vmem:[%s4 + $0x20] sm:$0xff]
    %v940 = vld [vmem:[%s4 + $0x28] sm:$0xff]
    %v941 = vld [vmem:[%s4 + $0x30] sm:$0xff]
    %v942 = vld [vmem:[%s4 + $0x38] sm:$0xff]
    %v943 = vld [vmem:[%s4 + $0x40] sm:$0xff]
    %v944 = vld [vmem:[%s4 + $0x48] sm:$0xff]
    %v945 = vld [vmem:[%s4 + $0x50] sm:$0xff]
    %v946 = vld [vmem:[%s4 + $0x58] sm:$0xff]
    %v947 = vld [vmem:[%s4 + $0x60] sm:$0xff]
    %v948 = vld [vmem:[%s4 + $0x68] sm:$0xff]
    %v949 = vld [vmem:[%s4 + $0x70] sm:$0xff]
    %v950 = vld [vmem:[%s4 + $0x78] sm:$0xff]
    %v951 = vld [vmem:[%s4 + $0x80] sm:$0xff]
    %v952 = vld [vmem:[%s4 + $0x88] sm:$0xff]
    %v953 = vld [vmem:[%s4 + $0x90] sm:$0xff]
    %v954 = vld [vmem:[%s4 + $0x98] sm:$0xff]
    %v955 = vld [vmem:[%s4 + $0xa0] sm:$0xff]
    %v956 = vld [vmem:[%s4 + $0xa8] sm:$0xff]
    %v957 = vld [vmem:[%s4 + $0xb0] sm:$0xff]
    %v958 = vld [vmem:[%s4 + $0xb8] sm:$0xff]
    %v959 = vld [vmem:[%s4 + $0xc0] sm:$0xff]
    %v960 = vld [vmem:[%s4 + $0xc8] sm:$0xff]
    %v961 = vld [vmem:[%s4 + $0xd0] sm:$0xff]
    %v962 = vld [vmem:[%s4 + $0xd8] sm:$0xff]
    %v963 = vld [vmem:[%s4 + $0xe0] sm:$0xff]
    %v964 = vld [vmem:[%s4 + $0xe8] sm:$0xff]
    %v965 = vld [vmem:[%s4 + $0xf0] sm:$0xff]
    %v966 = vld [vmem:[%s4 + $0xf8] sm:$0xff]
    %v967 = vld [vmem:[#allocation7] sm:$0x1]
    %v969 = vlaneseq
    %v970 = vshrl.u32 %v969, 7
    %v971 = vsub.s32 0, %v970
    %v972 = vrot.slane %v967, %v971
    %974 = vmatprep.subr.mxu0 0.0
    %975 = vmatpush1.msra.mxu0 %v935
    %976 = vmatprep.subr.mxu0 0.0
    %977 = vmatpush1.msra.mxu0 %v936
    %978 = vmatprep.subr.mxu0 0.0
    %979 = vmatpush1.msra.mxu0 %v937
    %980 = vmatprep.subr.mxu0 0.0
    %981 = vmatpush1.msra.mxu0 %v938
    %982 = vmatprep.subr.mxu0 0.0
    %983 = vmatpush1.msra.mxu0 %v939
    %984 = vmatprep.subr.mxu0 0.0
    %985 = vmatpush1.msra.mxu0 %v940
    %986 = vmatprep.subr.mxu0 0.0
    %987 = vmatpush1.msra.mxu0 %v941
    %988 = vmatprep.subr.mxu0 0.0
    %989 = vmatpush1.msra.mxu0 %v942
    %990 = vmatprep.subr.mxu0 0.0
    %991 = vmatpush1.msra.mxu0 %v943
    %992 = vmatprep.subr.mxu0 0.0
    %993 = vmatpush1.msra.mxu0 %v944
    %994 = vmatprep.subr.mxu0 0.0
    %995 = vmatpush1.msra.mxu0 %v945
    %996 = vmatprep.subr.mxu0 0.0
    %997 = vmatpush1.msra.mxu0 %v946
    %998 = vmatprep.subr.mxu0 0.0
    %999 = vmatpush1.msra.mxu0 %v947
    %1000 = vmatprep.subr.mxu0 0.0
    %1001 = vmatpush1.msra.mxu0 %v948
    %1002 = vmatprep.subr.mxu0 0.0
    %1003 = vmatpush1.msra.mxu0 %v949
    %1004 = vmatprep.subr.mxu0 0.0
    %1005 = vmatpush1.msra.mxu0 %v950
    %1006 = vmatprep.subr.mxu0 0.0
    %1007 = vmatpush1.msra.mxu0 %v951
    %1008 = vmatprep.subr.mxu0 0.0
    %1009 = vmatpush1.msra.mxu0 %v952
    %1010 = vmatprep.subr.mxu0 0.0
    %1011 = vmatpush1.msra.mxu0 %v953
    %1012 = vmatprep.subr.mxu0 0.0
    %1013 = vmatpush1.msra.mxu0 %v954
    %1014 = vmatprep.subr.mxu0 0.0
    %1015 = vmatpush1.msra.mxu0 %v955
    %1016 = vmatprep.subr.mxu0 0.0
    %1017 = vmatpush1.msra.mxu0 %v956
    %1018 = vmatprep.subr.mxu0 0.0
    %1019 = vmatpush1.msra.mxu0 %v957
    %1020 = vmatprep.subr.mxu0 0.0
    %1021 = vmatpush1.msra.mxu0 %v958
    %1022 = vmatprep.subr.mxu0 0.0
    %1023 = vmatpush1.msra.mxu0 %v959
    %1024 = vmatprep.subr.mxu0 0.0
    %1025 = vmatpush1.msra.mxu0 %v960
    %1026 = vmatprep.subr.mxu0 0.0
    %1027 = vmatpush1.msra.mxu0 %v961
    %1028 = vmatprep.subr.mxu0 0.0
    %1029 = vmatpush1.msra.mxu0 %v962
    %1030 = vmatprep.subr.mxu0 0.0
    %1031 = vmatpush1.msra.mxu0 %v963
    %1032 = vmatprep.subr.mxu0 0.0
    %1033 = vmatpush1.msra.mxu0 %v964
    %1034 = vmatprep.subr.mxu0 0.0
    %1035 = vmatpush1.msra.mxu0 %v965
    %1036 = vmatprep.subr.mxu0 0.0
    %1037 = vmatpush1.msra.mxu0 %v966
    %1038 = vmatprep.mubr.f32.mxu0 %v934
    %1039 = vmatmul.mubr.f32.gmra.mrb[0].mxu0 %v933
    %v1040 = vpop.f32.mrb[0].mxu0
    %v1041 = vadd.f32 %v972, %v1040
    %v1042 = vpop.f32.mrb[0].mxu0
    %1043 = vdwg.mxu0
    %vm1044 = vcmask 80896
    %1045 = vst.msk [vmem:[%s6] sm:$0xff] %vm1044, %v1041
    %v1046 = vsel %vm1044, %v1041, -inf
    %1047 = vmax.xlane.f32.xlu0 %v1046
    %v1048 = vpop.xlane.xlu0 %1047
    %v1049 = vsub.f32 %v1041, %v1048
    %v1050 = vmul.f32 %v1049, 1.442695
    %v1051 = vpow.pop %v1050
    %v1052 = vsel %vm1044, %v1051, 0.0
    %1053 = vadd.xlane.f32.xlu0 %v1052
    %v1054 = vpop.xlane.xlu0 %1053
    %v1055 = vlog2.pop %v1054
    %v1056 = vmul.f32 %v1055, 0.6931472
    %v1057 = vsub.f32 %v1049, %v1056
    %1058 = vst.msk [vmem:[%s7] sm:$0xff] %vm1044, %v1057
    // Predicated region
    $region42: #{two_stage_forward.3} parent=1 // pred_check
      _
    $region43: #{two_stage_forward.3} parent=1 // pred_check_branch
      %1060 = sbr.rel (0) target = $region45
    $region44: #{two_stage_forward.3} parent=1 // pred_region
      _
    $region45: #{two_stage_forward.3} parent=1 // pred_fallthru
      _
    // Predicated region
    $region46: #{two_stage_forward.3} parent=1 // pred_check
      _
    $region47: #{two_stage_forward.3} parent=1 // pred_check_branch
      %1062 = sbr.rel (0) target = $region49
    $region48: #{two_stage_forward.3} parent=1 // pred_region
      _
    $region49: #{two_stage_forward.3} parent=1 // pred_fallthru
      _
    // Predicated region
    $region50: #{two_stage_forward.3} parent=1 // pred_check
      _
    $region51: #{two_stage_forward.3} parent=1 // pred_check_branch
      %1064 = sbr.rel (0) target = $region53
    $region52: #{two_stage_forward.3} parent=1 // pred_region
      _
    $region53: #{two_stage_forward.3} parent=1 // pred_fallthru
      _
    // Predicated region
    $region54: #{two_stage_forward.3} parent=1 // pred_check
      _
    $region55: #{two_stage_forward.3} parent=1 // pred_check_branch
      %1066 = sbr.rel (0) target = $region57
    $region56: #{two_stage_forward.3} parent=1 // pred_region
      _
    $region57: #{two_stage_forward.3} parent=1 // pred_fallthru
      _
    // Predicated region
    $region58: #{two_stage_forward.3} parent=1 // pred_check
      _
    $region59: #{two_stage_forward.3} parent=1 // pred_check_branch
      %1068 = sbr.rel (0) target = $region61
    $region60: #{two_stage_forward.3} parent=1 // pred_region
      _
    $region61: #{two_stage_forward.3} parent=1 // pred_fallthru
      _
    // Predicated region
    $region62: #{two_stage_forward.3} parent=1 // pred_check
      _
    $region63: #{two_stage_forward.3} parent=1 // pred_check_branch
      %1070 = sbr.rel (0) target = $region65
    $region64: #{two_stage_forward.3} parent=1 // pred_region
      _
    $region65: #{two_stage_forward.3} parent=1 // pred_fallthru
      _
    %1071 = vsyncpa [#allocation3], 1
    %1072 = vsyncpa [#allocation5], 1
    %1073 = vsyncpa [#allocation8], 1

// kernel: two_stage_forward.5
$region0: #{two_stage_forward.5}
  #allocation0 [shape = 'u32[]', space=smem, size = 0x4, offset = 0x4, fixed_abs, tag = 'smem constant byte address 0x4 - core index']
  #allocation1 [shape = 'u32[144,128]{1,0:T(1,128)}', space=vmem, size = 0x12000, scoped, tag = 'internal scratch']
  %s0 = inlined_call_operand.vmem [shape: f32[2,2], index: 0, kind: input, shape index: {}]
  %s1 = inlined_call_operand.vmem [shape: s32[2,2], index: 1, kind: input, shape index: {}]
  %s2 = inlined_call_operand.hbm [shape: f32[2,10], index: 2, kind: output, shape index: {}]
  %s3 = sld [smem:[#allocation0]]
  $region18: #{two_stage_forward.5} parent=0
    _
  %s5 = ssub.s32 1, %s3
  %s6 = scalar_select 0, %s5, %s3
  $region1: #{two_stage_forward.5} parent=0
    #allocation2 [shape = 'u8[1024]{0}', space=vmem, size = 0x400, scoped, tag = 'output window, operand 0, single buffered']
    #allocation3 [shape = 's32[1]{0}', space=sflag, size = 0x4, scoped, tag = 'scoped memory for two_stage_forward.5']
    %7 = vsyncpa [#allocation3], 0
    // Predicated region
    $region2: #{two_stage_forward.5} parent=1 // pred_check
      _
    $region3: #{two_stage_forward.5} parent=1 // pred_check_branch
      %9 = sbr.rel (0) target = $region5
    $region4: #{two_stage_forward.5} parent=1 // pred_region
      _
    $region5: #{two_stage_forward.5} parent=1 // pred_fallthru
      _
    // Predicated region
    $region6: #{two_stage_forward.5} parent=1 // pred_check
      _
    $region7: #{two_stage_forward.5} parent=1 // pred_check_branch
      %11 = sbr.rel (0) target = $region9
    $region8: #{two_stage_forward.5} parent=1 // pred_region
      _
    $region9: #{two_stage_forward.5} parent=1 // pred_fallthru
      _
    %v12 = vld [vmem:[%s0] sm:$0x3]
    %v13 = vld [vmem:[%s1] sm:$0x3]
    %v14 = vlaneseq
    %v15 = vand.u32 %v14, 127
    %16 = vset.pattern.permute.xlu0 0
    %17 = vperm.xlu0 %16, %v13
    %v18 = vpop.permute.xlu0 %17
    %vm19 = vcmp.eq.s32.totalorder %v15, %v18
    %21 = vset.pattern.permute.xlu0 0
    %22 = vperm.xlu0 %21, %v12
    %v23 = vpop.permute.xlu0 %22
    %v25 = vsel %vm19, %v23, -100.0
    %26 = vset.pattern.permute.xlu0 1
    %27 = vperm.xlu0 %26, %v13
    %v28 = vpop.permute.xlu0 %27
    %vm29 = vcmp.eq.s32.totalorder %v15, %v28
    %30 = vset.pattern.permute.xlu0 1
    %31 = vperm.xlu0 %30, %v12
    %v32 = vpop.permute.xlu0 %31
    %v34 = vsel %vm29, %v32, %v25
    %vm35 = vcmask 74752
    %v36 = vsel %vm35, %v34, -inf
    %37 = vmax.xlane.f32.xlu0 %v36
    %v38 = vpop.xlane.xlu0 %37
    %v39 = vsub.f32 %v34, %v38
    %v40 = vmul.f32 %v39, 1.442695
    %v41 = vpow.pop %v40
    %v42 = vsel %vm35, %v41, 0.0
    %43 = vadd.xlane.f32.xlu0 %v42
    %v44 = vpop.xlane.xlu0 %43
    %v45 = vlog2.pop %v44
    %v46 = vmul.f32 %v45, 0.6931472
    %v47 = vsub.f32 %v39, %v46
    %48 = vst.msk [vmem:[#allocation2] sm:$0x3] %vm35, %v47
    // Predicated region
    $region10: #{two_stage_forward.5} parent=1 // pred_check
      _
    $region11: #{two_stage_forward.5} parent=1 // pred_check_branch
      %50 = sbr.rel (0) target = $region13
    $region12: #{two_stage_forward.5} parent=1 // pred_region
      %s52 = ssub.s32 32, 32
      %53 = vsyncadd [#allocation3], %s52
      %s55 = sshll.u32 [#allocation2], 4
      %s56 = int_to_ptr.vmem [resolvable:$true] %s55
      %58 = dma.vmem_to_hbm [thread:$0]  %s56, 32, %s2, [#allocation3]
    $region13: #{two_stage_forward.5} parent=1 // pred_fallthru
      _
    // Predicated region
    $region14: #{two_stage_forward.5} parent=1 // pred_check
      _
    $region15: #{two_stage_forward.5} parent=1 // pred_check_branch
      %60 = sbr.rel (0) target = $region17
    $region16: #{two_stage_forward.5} parent=1 // pred_region
      %61 = dma.done [#allocation3], 32
    $region17: #{two_stage_forward.5} parent=1 // pred_fallthru
      _
    %62 = vsyncpa [#allocation3], 1

</llo_original>
